<compile_context>
chip_gen: v6e
topology: v6e:2x2x1
jax: 0.10.0
libtpu: 0.0.40
codegen_flags: <defaults>
</compile_context>

<pallas_src>
import math
import numpy as np

import jax
import jax.numpy as jnp
from jax.experimental import pallas as pl
from jax.experimental.pallas import tpu as pltpu

LANE = 128


# ----------------------------------------------------------------------------
# Host-side (numpy) precomputation of Bessel roots and normalizers
# ----------------------------------------------------------------------------
def _spherical_jn_np(x, n):
    """Spherical Bessel j_n(x) via upward recurrence (numpy, float64)."""
    x = np.asarray(x, dtype=np.float64)
    j0 = np.sin(x) / x
    if n == 0:
        return j0
    j1 = np.sin(x) / (x * x) - np.cos(x) / x
    if n == 1:
        return j1
    jm1, j = j0, j1
    for m in range(1, n):
        jp1 = (2 * m + 1) / x * j - jm1
        jm1, j = j, jp1
    return j


def _jn_zeros(n, k):
    """First k roots of spherical Bessel j_l for l in [0, n) (DimeNet style)."""
    zerosj = np.zeros((n, k), dtype=np.float64)
    zerosj[0] = np.arange(1, k + 1) * np.pi
    points = np.arange(1, k + n) * np.pi
    racines = np.zeros(k + n - 1, dtype=np.float64)
    for i in range(1, n):
        for j in range(k + n - 1 - i):
            a, b = float(points[j]), float(points[j + 1])
            fa = float(_spherical_jn_np(a, i))
            for _ in range(200):  # bisection
                m = 0.5 * (a + b)
                fm = float(_spherical_jn_np(m, i))
                if fa * fm <= 0.0:
                    b = m
                else:
                    a, fa = m, fm
            racines[j] = 0.5 * (a + b)
        points = racines.copy()
        zerosj[i][:k] = racines[:k]
    return zerosj


def _bessel_constants(num_spherical, num_radial):
    zeros = _jn_zeros(num_spherical, num_radial)             # [L, N]
    norm = np.zeros_like(zeros)
    for l in range(num_spherical):
        for n in range(num_radial):
            norm[l, n] = 1.0 / math.sqrt(
                0.5 * float(_spherical_jn_np(zeros[l, n], l + 1)) ** 2
            )
    return zeros, norm


# ----------------------------------------------------------------------------
# Pallas kernel
# ----------------------------------------------------------------------------
def _make_kernel(num_spherical, num_radial, envelope_exponent, zeros, norm,
                 ln_pad):
    L, N = num_spherical, num_radial
    LN = L * N
    p = envelope_exponent + 1
    a_env = -(p + 1) * (p + 2) / 2.0
    b_env = p * (p + 2) * 1.0
    c_env = -p * (p + 1) / 2.0

    # Compile-time constants: root z_{l,n}, its reciprocal, and the fused
    # coefficient norm_{l,n} * sqrt((2l+1)/4pi).
    z_const = [[float(zeros[l, n]) for n in range(N)] for l in range(L)]
    inv_z_const = [[1.0 / float(zeros[l, n]) for n in range(N)] for l in range(L)]
    coef_const = [[float(norm[l, n]) * math.sqrt((2 * l + 1) / (4.0 * math.pi))
                   for n in range(N)] for l in range(L)]
    inv_l_const = [0.0 if l == 0 else 1.0 / l for l in range(L)]

    def kernel(d_ref, ang_ref, out_ref):
        d = d_ref[...]          # [sb, 128] scaled distance d_kj
        theta = ang_ref[...]    # [sb, 128] angle

        # Single vector divide per block; every other division below becomes a
        # multiply with a compile-time reciprocal.
        inv_d = 1.0 / d

        # Envelope: (1/d + a d^(p-1) + b d^p + c d^(p+1)) * (d < 1)
        d_pm1 = d ** (p - 1)                       # integer_pow -> multiplies
        d_p = d_pm1 * d
        d_pp1 = d_p * d
        env = (inv_d + a_env * d_pm1 + b_env * d_p + c_env * d_pp1) \
            * (d < 1.0).astype(d.dtype)

        # Real spherical harmonics (m = 0): sqrt((2l+1)/4pi) * P_l(cos theta)
        # (the sqrt factor is folded into coef_const).
        ct = jnp.cos(theta)
        P = [jnp.ones_like(ct)]
        if L > 1:
            P.append(ct)
        for l in range(2, L):
            P.append(((2 * l - 1) * ct * P[l - 1] - (l - 1) * P[l - 2])
                     * inv_l_const[l])

        # Stream each (l, n) row straight to out_ref (no stack / relayout).
        row = 0
        for l in range(L):
            yP = env * P[l]                        # shared per-l factor
            for n in range(N):
                z = z_const[l][n]
                inv_x = inv_z_const[l][n] * inv_d
                x = z * d
                sx = jnp.sin(x)
                j0 = sx * inv_x
                if l == 0:
                    j = j0                         # no cos needed for l == 0
                else:
                    cx = jnp.cos(x)
                    j1 = (j0 - cx) * inv_x         # sin/x^2 - cos/x
                    if l == 1:
                        j = j1
                    else:
                        jm1, j = j0, j1
                        for m in range(1, l):
                            jp1 = (2 * m + 1) * inv_x * j - jm1
                            jm1, j = j, jp1
                out_ref[row] = coef_const[l][n] * j * yP
                row += 1

        # Zero the padded output rows (LN -> ln_pad); sliced away by wrapper.
        if ln_pad > LN:
            zero = jnp.zeros_like(d)
            for r in range(LN, ln_pad):
                out_ref[r] = zero

    return kernel


# ----------------------------------------------------------------------------
# Wrapper (glue: gather, padding, block/grid selection, reshape)
# ----------------------------------------------------------------------------
def spherical_bessel_basis(distance, angle, angle_index, *, num_radial,
                           num_spherical, cut_off, envelope_exponent):
    L, N = num_spherical, num_radial
    LN = L * N
    LN_pad = pl.cdiv(LN, 8) * 8

    zeros, norm = _bessel_constants(L, N)
    kernel = _make_kernel(L, N, envelope_exponent, zeros, norm, LN_pad)

    kj_index = angle_index[0]
    d_kj = (distance[kj_index] / cut_off).astype(jnp.float32)   # [A] gather (glue)
    angle = angle.astype(jnp.float32)
    A = angle.shape[0]

    # --- block / grid selection (sublane-dense along the angle axis) -------
    rows = max(1, pl.cdiv(A, LANE))            # 128-lane rows of angles
    rows8 = pl.cdiv(rows, 8) * 8               # sublane multiple of 8
    sb = min(64, rows8)                        # <= 8K angles per grid step
    if rows8 // sb < 2 and rows8 >= 16:
        # Prefer >= 2 grid steps so v7x's two TensorCores both get work.
        sb = max(8, ((rows8 // 2) // 8) * 8)
    rows_pad = pl.cdiv(rows8, sb) * sb
    grid_n = rows_pad // sb
    A_pad = rows_pad * LANE

    # Pad with 0.5 (benign, avoids 1/0); padded lanes are sliced away.
    d_pad = jnp.full((A_pad,), 0.5, jnp.float32).at[:A].set(d_kj)
    ang_pad = jnp.zeros((A_pad,), jnp.float32).at[:A].set(angle)
    d_pad = d_pad.reshape(rows_pad, LANE)
    ang_pad = ang_pad.reshape(rows_pad, LANE)

    # Advisory cost hint: transcendentals dominate, flops/bytes look tiny.
    trans_per_angle = 1 + N + 2 * N * max(0, L - 1)
    cost = pl.CostEstimate(
        flops=A_pad * (12 * LN + 24),
        transcendentals=A_pad * trans_per_angle,
        bytes_accessed=(2 * A_pad + LN_pad * A_pad) * 4,
    )

    out = pl.pallas_call(
        kernel,
        out_shape=jax.ShapeDtypeStruct((LN_pad, rows_pad, LANE), jnp.float32),
        grid=(grid_n,),
        in_specs=[pl.BlockSpec((sb, LANE), lambda i: (i, 0)),
                  pl.BlockSpec((sb, LANE), lambda i: (i, 0))],
        out_specs=pl.BlockSpec((LN_pad, sb, LANE), lambda i: (0, i, 0)),
        compiler_params=pltpu.CompilerParams(dimension_semantics=("parallel",)),
        cost_estimate=cost,
    )(d_pad, ang_pad)

    # [LN_pad, rows_pad, 128] -> [LN, A_pad] -> [A, L, N]
    out = out[:LN].reshape(LN, A_pad)[:, :A]
    return out.T.reshape(A, L, N)


# ----------------------------------------------------------------------------
# Numpy reference (same closed-form math) for a plumbing sanity check
# ----------------------------------------------------------------------------
def _reference_np(distance, angle, angle_index, num_radial, num_spherical,
                  cut_off, envelope_exponent):
    zeros, norm = _bessel_constants(num_spherical, num_radial)
    p = envelope_exponent + 1
    a = -(p + 1) * (p + 2) / 2.0
    b = p * (p + 2) * 1.0
    c = -p * (p + 1) / 2.0
    d = distance[angle_index[0]] / cut_off
    env = (1.0 / d + a * d ** (p - 1) + b * d ** p + c * d ** (p + 1)) * (d < 1.0)
    ct = np.cos(angle)
    P = [np.ones_like(ct), ct]
    for l in range(2, num_spherical):
        P.append(((2 * l - 1) * ct * P[l - 1] - (l - 1) * P[l - 2]) / l)
    out = np.zeros((angle.shape[0], num_spherical, num_radial), dtype=np.float64)
    for l in range(num_spherical):
        y_l = math.sqrt((2 * l + 1) / (4.0 * math.pi)) * P[l]
        for n in range(num_radial):
            j_ln = _spherical_jn_np(zeros[l, n] * d, l)
            out[:, l, n] = env * norm[l, n] * j_ln * y_l
    return out


# ----------------------------------------------------------------------------
if __name__ == "__main__":
    num_radial = 4
    num_spherical = 3
    cut_off = 5.0
    envelope_exponent = 5

    E = 20   # number of edges
    A = 16   # number of angles

    key = jax.random.PRNGKey(0)
    k1, k2, k3, k4 = jax.random.split(key, 4)
    distance = jax.random.uniform(k1, (E,), jnp.float32, 0.5, 4.5)
    angle = jax.random.uniform(k2, (A,), jnp.float32, 0.0, math.pi)
    kj_index = jax.random.randint(k3, (A,), 0, E, jnp.int32)
    ji_index = jax.random.randint(k4, (A,), 0, E, jnp.int32)
    angle_index = jnp.stack([kj_index, ji_index], axis=0)  # [2, A]

    out = spherical_bessel_basis(
        distance, angle, angle_index,
        num_radial=num_radial, num_spherical=num_spherical,
        cut_off=cut_off, envelope_exponent=envelope_exponent)
    out = jax.block_until_ready(out)

    ref = _reference_np(np.asarray(distance, np.float64),
                        np.asarray(angle, np.float64),
                        np.asarray(angle_index), num_radial, num_spherical,
                        cut_off, envelope_exponent)
    assert out.shape == (A, num_spherical, num_radial)
    assert np.allclose(np.asarray(out), ref, rtol=1e-4, atol=1e-5)

    print("KERNEL_OK")
</pallas_src>

<mosaic_0001>
module attributes {stable_mosaic.version = 11 : i64} {
  func.func @kernel(%arg0: i32, %arg1: memref<8x128xf32, #tpu.memory_space<vmem>>, %arg2: memref<8x128xf32, #tpu.memory_space<vmem>>, %arg3: memref<16x8x128xf32, #tpu.memory_space<vmem>>) attributes {dimension_semantics = [#tpu.dimension_semantics<parallel>], iteration_bounds = array<i64: 1>, scalar_prefetch = 0 : i64, scratch_operands = 0 : i64, tpu.core_type = #tpu.core_type<tc>, window_params = [{transform_indices = @transform_0, window_bounds = array<i64: 8, 128>}, {transform_indices = @transform_1, window_bounds = array<i64: 8, 128>}, {transform_indices = @transform_2, window_bounds = array<i64: 16, 8, 128>}]} {
    %c0 = arith.constant 0 : index
    %c0_0 = arith.constant 0 : index
    %0 = vector.load %arg1[%c0, %c0_0] : memref<8x128xf32, #tpu.memory_space<vmem>>, vector<8x128xf32>
    %c0_1 = arith.constant 0 : index
    %c0_2 = arith.constant 0 : index
    %1 = vector.load %arg2[%c0_1, %c0_2] : memref<8x128xf32, #tpu.memory_space<vmem>>, vector<8x128xf32>
    %cst = arith.constant 1.000000e+00 : f32
    %2 = vector.broadcast %cst : f32 to vector<8x128xf32>
    %3 = arith.divf %2, %0 : vector<8x128xf32>
    %4 = arith.mulf %0, %0 : vector<8x128xf32>
    %5 = arith.mulf %4, %4 : vector<8x128xf32>
    %6 = arith.mulf %0, %5 : vector<8x128xf32>
    %7 = arith.mulf %6, %0 : vector<8x128xf32>
    %8 = arith.mulf %7, %0 : vector<8x128xf32>
    %cst_3 = arith.constant -2.800000e+01 : f32
    %9 = vector.broadcast %cst_3 : f32 to vector<8x128xf32>
    %10 = arith.mulf %9, %6 : vector<8x128xf32>
    %11 = arith.addf %3, %10 : vector<8x128xf32>
    %cst_4 = arith.constant 4.800000e+01 : f32
    %12 = vector.broadcast %cst_4 : f32 to vector<8x128xf32>
    %13 = arith.mulf %12, %7 : vector<8x128xf32>
    %14 = arith.addf %11, %13 : vector<8x128xf32>
    %cst_5 = arith.constant -2.100000e+01 : f32
    %15 = vector.broadcast %cst_5 : f32 to vector<8x128xf32>
    %16 = arith.mulf %15, %8 : vector<8x128xf32>
    %17 = arith.addf %14, %16 : vector<8x128xf32>
    %cst_6 = arith.constant 1.000000e+00 : f32
    %18 = vector.broadcast %cst_6 : f32 to vector<8x128xf32>
    %19 = arith.cmpf olt, %0, %18 : vector<8x128xf32>
    %20 = arith.extui %19 : vector<8x128xi1> to vector<8x128xi32>
    %21 = arith.sitofp %20 : vector<8x128xi32> to vector<8x128xf32>
    %22 = arith.mulf %17, %21 : vector<8x128xf32>
    %23 = math.cos %1 : vector<8x128xf32>
    %cst_7 = arith.constant 1.000000e+00 : f32
    %24 = vector.broadcast %cst_7 : f32 to vector<8x128xf32>
    %cst_8 = arith.constant 3.000000e+00 : f32
    %25 = vector.broadcast %cst_8 : f32 to vector<8x128xf32>
    %26 = arith.mulf %25, %23 : vector<8x128xf32>
    %27 = arith.mulf %26, %23 : vector<8x128xf32>
    %cst_9 = arith.constant 1.000000e+00 : f32
    %28 = vector.broadcast %cst_9 : f32 to vector<8x128xf32>
    %29 = arith.mulf %28, %24 : vector<8x128xf32>
    %30 = arith.subf %27, %29 : vector<8x128xf32>
    %cst_10 = arith.constant 5.000000e-01 : f32
    %31 = vector.broadcast %cst_10 : f32 to vector<8x128xf32>
    %32 = arith.mulf %30, %31 : vector<8x128xf32>
    %33 = arith.mulf %22, %24 : vector<8x128xf32>
    %cst_11 = arith.constant 0.318309873 : f32
    %34 = vector.broadcast %cst_11 : f32 to vector<8x128xf32>
    %35 = arith.mulf %34, %3 : vector<8x128xf32>
    %cst_12 = arith.constant 3.14159274 : f32
    %36 = vector.broadcast %cst_12 : f32 to vector<8x128xf32>
    %37 = arith.mulf %36, %0 : vector<8x128xf32>
    %38 = math.sin %37 : vector<8x128xf32>
    %39 = arith.mulf %38, %35 : vector<8x128xf32>
    %cst_13 = arith.constant 1.25331414 : f32
    %40 = vector.broadcast %cst_13 : f32 to vector<8x128xf32>
    %41 = arith.mulf %40, %39 : vector<8x128xf32>
    %42 = arith.mulf %41, %33 : vector<8x128xf32>
    %c0_14 = arith.constant 0 : index
    %c0_15 = arith.constant 0 : index
    %c0_16 = arith.constant 0 : index
    %43 = vector.load %arg3[%c0_14, %c0_15, %c0_16] : memref<16x8x128xf32, #tpu.memory_space<vmem>>, vector<1x8x128xf32>
    %44 = vector.shape_cast %43 : vector<1x8x128xf32> to vector<8x128xf32>
    %45 = vector.shape_cast %42 : vector<8x128xf32> to vector<1x8x128xf32>
    tpu.vector_store %arg3[%c0_14, %c0_15, %c0_16], %45 {strides = array<i32>} : memref<16x8x128xf32, #tpu.memory_space<vmem>>, vector<1x8x128xf32>,
    %cst_17 = arith.constant 0.159154937 : f32
    %46 = vector.broadcast %cst_17 : f32 to vector<8x128xf32>
    %47 = arith.mulf %46, %3 : vector<8x128xf32>
    %cst_18 = arith.constant 6.28318548 : f32
    %48 = vector.broadcast %cst_18 : f32 to vector<8x128xf32>
    %49 = arith.mulf %48, %0 : vector<8x128xf32>
    %50 = math.sin %49 : vector<8x128xf32>
    %51 = arith.mulf %50, %47 : vector<8x128xf32>
    %cst_19 = arith.constant 2.50662827 : f32
    %52 = vector.broadcast %cst_19 : f32 to vector<8x128xf32>
    %53 = arith.mulf %52, %51 : vector<8x128xf32>
    %54 = arith.mulf %53, %33 : vector<8x128xf32>
    %c1 = arith.constant 1 : index
    %c0_20 = arith.constant 0 : index
    %c0_21 = arith.constant 0 : index
    %55 = vector.load %arg3[%c1, %c0_20, %c0_21] : memref<16x8x128xf32, #tpu.memory_space<vmem>>, vector<1x8x128xf32>
    %56 = vector.shape_cast %55 : vector<1x8x128xf32> to vector<8x128xf32>
    %57 = vector.shape_cast %54 : vector<8x128xf32> to vector<1x8x128xf32>
    tpu.vector_store %arg3[%c1, %c0_20, %c0_21], %57 {strides = array<i32>} : memref<16x8x128xf32, #tpu.memory_space<vmem>>, vector<1x8x128xf32>,
    %cst_22 = arith.constant 0.106103294 : f32
    %58 = vector.broadcast %cst_22 : f32 to vector<8x128xf32>
    %59 = arith.mulf %58, %3 : vector<8x128xf32>
    %cst_23 = arith.constant 9.42477798 : f32
    %60 = vector.broadcast %cst_23 : f32 to vector<8x128xf32>
    %61 = arith.mulf %60, %0 : vector<8x128xf32>
    %62 = math.sin %61 : vector<8x128xf32>
    %63 = arith.mulf %62, %59 : vector<8x128xf32>
    %cst_24 = arith.constant 3.75994229 : f32
    %64 = vector.broadcast %cst_24 : f32 to vector<8x128xf32>
    %65 = arith.mulf %64, %63 : vector<8x128xf32>
    %66 = arith.mulf %65, %33 : vector<8x128xf32>
    %c2 = arith.constant 2 : index
    %c0_25 = arith.constant 0 : index
    %c0_26 = arith.constant 0 : index
    %67 = vector.load %arg3[%c2, %c0_25, %c0_26] : memref<16x8x128xf32, #tpu.memory_space<vmem>>, vector<1x8x128xf32>
    %68 = vector.shape_cast %67 : vector<1x8x128xf32> to vector<8x128xf32>
    %69 = vector.shape_cast %66 : vector<8x128xf32> to vector<1x8x128xf32>
    tpu.vector_store %arg3[%c2, %c0_25, %c0_26], %69 {strides = array<i32>} : memref<16x8x128xf32, #tpu.memory_space<vmem>>, vector<1x8x128xf32>,
    %cst_27 = arith.constant 0.0795774683 : f32
    %70 = vector.broadcast %cst_27 : f32 to vector<8x128xf32>
    %71 = arith.mulf %70, %3 : vector<8x128xf32>
    %cst_28 = arith.constant 12.566371 : f32
    %72 = vector.broadcast %cst_28 : f32 to vector<8x128xf32>
    %73 = arith.mulf %72, %0 : vector<8x128xf32>
    %74 = math.sin %73 : vector<8x128xf32>
    %75 = arith.mulf %74, %71 : vector<8x128xf32>
    %cst_29 = arith.constant 5.01325655 : f32
    %76 = vector.broadcast %cst_29 : f32 to vector<8x128xf32>
    %77 = arith.mulf %76, %75 : vector<8x128xf32>
    %78 = arith.mulf %77, %33 : vector<8x128xf32>
    %c3 = arith.constant 3 : index
    %c0_30 = arith.constant 0 : index
    %c0_31 = arith.constant 0 : index
    %79 = vector.load %arg3[%c3, %c0_30, %c0_31] : memref<16x8x128xf32, #tpu.memory_space<vmem>>, vector<1x8x128xf32>
    %80 = vector.shape_cast %79 : vector<1x8x128xf32> to vector<8x128xf32>
    %81 = vector.shape_cast %78 : vector<8x128xf32> to vector<1x8x128xf32>
    tpu.vector_store %arg3[%c3, %c0_30, %c0_31], %81 {strides = array<i32>} : memref<16x8x128xf32, #tpu.memory_space<vmem>>, vector<1x8x128xf32>,
    %82 = arith.mulf %22, %23 : vector<8x128xf32>
    %cst_32 = arith.constant 0.222548157 : f32
    %83 = vector.broadcast %cst_32 : f32 to vector<8x128xf32>
    %84 = arith.mulf %83, %3 : vector<8x128xf32>
    %cst_33 = arith.constant 4.49340963 : f32
    %85 = vector.broadcast %cst_33 : f32 to vector<8x128xf32>
    %86 = arith.mulf %85, %0 : vector<8x128xf32>
    %87 = math.sin %86 : vector<8x128xf32>
    %88 = arith.mulf %87, %84 : vector<8x128xf32>
    %89 = math.cos %86 : vector<8x128xf32>
    %90 = arith.subf %88, %89 : vector<8x128xf32>
    %91 = arith.mulf %90, %84 : vector<8x128xf32>
    %cst_34 = arith.constant 3.18085337 : f32
    %92 = vector.broadcast %cst_34 : f32 to vector<8x128xf32>
    %93 = arith.mulf %92, %91 : vector<8x128xf32>
    %94 = arith.mulf %93, %82 : vector<8x128xf32>
    %c4 = arith.constant 4 : index
    %c0_35 = arith.constant 0 : index
    %c0_36 = arith.constant 0 : index
    %95 = vector.load %arg3[%c4, %c0_35, %c0_36] : memref<16x8x128xf32, #tpu.memory_space<vmem>>, vector<1x8x128xf32>
    %96 = vector.shape_cast %95 : vector<1x8x128xf32> to vector<8x128xf32>
    %97 = vector.shape_cast %94 : vector<8x128xf32> to vector<1x8x128xf32>
    tpu.vector_store %arg3[%c4, %c0_35, %c0_36], %97 {strides = array<i32>} : memref<16x8x128xf32, #tpu.memory_space<vmem>>, vector<1x8x128xf32>,
    %cst_37 = arith.constant 0.129445612 : f32
    %98 = vector.broadcast %cst_37 : f32 to vector<8x128xf32>
    %99 = arith.mulf %98, %3 : vector<8x128xf32>
    %cst_38 = arith.constant 7.72525167 : f32
    %100 = vector.broadcast %cst_38 : f32 to vector<8x128xf32>
    %101 = arith.mulf %100, %0 : vector<8x128xf32>
    %102 = math.sin %101 : vector<8x128xf32>
    %103 = arith.mulf %102, %99 : vector<8x128xf32>
    %104 = math.cos %101 : vector<8x128xf32>
    %105 = arith.subf %103, %104 : vector<8x128xf32>
    %106 = arith.mulf %105, %99 : vector<8x128xf32>
    %cst_39 = arith.constant 5.38259554 : f32
    %107 = vector.broadcast %cst_39 : f32 to vector<8x128xf32>
    %108 = arith.mulf %107, %106 : vector<8x128xf32>
    %109 = arith.mulf %108, %82 : vector<8x128xf32>
    %c5 = arith.constant 5 : index
    %c0_40 = arith.constant 0 : index
    %c0_41 = arith.constant 0 : index
    %110 = vector.load %arg3[%c5, %c0_40, %c0_41] : memref<16x8x128xf32, #tpu.memory_space<vmem>>, vector<1x8x128xf32>
    %111 = vector.shape_cast %110 : vector<1x8x128xf32> to vector<8x128xf32>
    %112 = vector.shape_cast %109 : vector<8x128xf32> to vector<1x8x128xf32>
    tpu.vector_store %arg3[%c5, %c0_40, %c0_41], %112 {strides = array<i32>} : memref<16x8x128xf32, #tpu.memory_space<vmem>>, vector<1x8x128xf32>,
    %cst_42 = arith.constant 0.091708444 : f32
    %113 = vector.broadcast %cst_42 : f32 to vector<8x128xf32>
    %114 = arith.mulf %113, %3 : vector<8x128xf32>
    %cst_43 = arith.constant 10.9041214 : f32
    %115 = vector.broadcast %cst_43 : f32 to vector<8x128xf32>
    %116 = arith.mulf %115, %0 : vector<8x128xf32>
    %117 = math.sin %116 : vector<8x128xf32>
    %118 = arith.mulf %117, %114 : vector<8x128xf32>
    %119 = math.cos %116 : vector<8x128xf32>
    %120 = arith.subf %118, %119 : vector<8x128xf32>
    %121 = arith.mulf %120, %114 : vector<8x128xf32>
    %cst_44 = arith.constant 7.56623888 : f32
    %122 = vector.broadcast %cst_44 : f32 to vector<8x128xf32>
    %123 = arith.mulf %122, %121 : vector<8x128xf32>
    %124 = arith.mulf %123, %82 : vector<8x128xf32>
    %c6 = arith.constant 6 : index
    %c0_45 = arith.constant 0 : index
    %c0_46 = arith.constant 0 : index
    %125 = vector.load %arg3[%c6, %c0_45, %c0_46] : memref<16x8x128xf32, #tpu.memory_space<vmem>>, vector<1x8x128xf32>
    %126 = vector.shape_cast %125 : vector<1x8x128xf32> to vector<8x128xf32>
    %127 = vector.shape_cast %124 : vector<8x128xf32> to vector<1x8x128xf32>
    tpu.vector_store %arg3[%c6, %c0_45, %c0_46], %127 {strides = array<i32>} : memref<16x8x128xf32, #tpu.memory_space<vmem>>, vector<1x8x128xf32>,
    %cst_47 = arith.constant 0.0710924342 : f32
    %128 = vector.broadcast %cst_47 : f32 to vector<8x128xf32>
    %129 = arith.mulf %128, %3 : vector<8x128xf32>
    %cst_48 = arith.constant 14.0661936 : f32
    %130 = vector.broadcast %cst_48 : f32 to vector<8x128xf32>
    %131 = arith.mulf %130, %0 : vector<8x128xf32>
    %132 = math.sin %131 : vector<8x128xf32>
    %133 = arith.mulf %132, %129 : vector<8x128xf32>
    %134 = math.cos %131 : vector<8x128xf32>
    %135 = arith.subf %133, %134 : vector<8x128xf32>
    %136 = arith.mulf %135, %129 : vector<8x128xf32>
    %cst_49 = arith.constant 9.74410629 : f32
    %137 = vector.broadcast %cst_49 : f32 to vector<8x128xf32>
    %138 = arith.mulf %137, %136 : vector<8x128xf32>
    %139 = arith.mulf %138, %82 : vector<8x128xf32>
    %c7 = arith.constant 7 : index
    %c0_50 = arith.constant 0 : index
    %c0_51 = arith.constant 0 : index
    %140 = vector.load %arg3[%c7, %c0_50, %c0_51] : memref<16x8x128xf32, #tpu.memory_space<vmem>>, vector<1x8x128xf32>
    %141 = vector.shape_cast %140 : vector<1x8x128xf32> to vector<8x128xf32>
    %142 = vector.shape_cast %139 : vector<8x128xf32> to vector<1x8x128xf32>
    tpu.vector_store %arg3[%c7, %c0_50, %c0_51], %142 {strides = array<i32>} : memref<16x8x128xf32, #tpu.memory_space<vmem>>, vector<1x8x128xf32>,
    %143 = arith.mulf %22, %32 : vector<8x128xf32>
    %cst_52 = arith.constant 0.173506916 : f32
    %144 = vector.broadcast %cst_52 : f32 to vector<8x128xf32>
    %145 = arith.mulf %144, %3 : vector<8x128xf32>
    %cst_53 = arith.constant 5.76345921 : f32
    %146 = vector.broadcast %cst_53 : f32 to vector<8x128xf32>
    %147 = arith.mulf %146, %0 : vector<8x128xf32>
    %148 = math.sin %147 : vector<8x128xf32>
    %149 = arith.mulf %148, %145 : vector<8x128xf32>
    %150 = math.cos %147 : vector<8x128xf32>
    %151 = arith.subf %149, %150 : vector<8x128xf32>
    %152 = arith.mulf %151, %145 : vector<8x128xf32>
    %cst_54 = arith.constant 3.000000e+00 : f32
    %153 = vector.broadcast %cst_54 : f32 to vector<8x128xf32>
    %154 = arith.mulf %153, %145 : vector<8x128xf32>
    %155 = arith.mulf %154, %152 : vector<8x128xf32>
    %156 = arith.subf %155, %149 : vector<8x128xf32>
    %cst_55 = arith.constant 5.38855743 : f32
    %157 = vector.broadcast %cst_55 : f32 to vector<8x128xf32>
    %158 = arith.mulf %157, %156 : vector<8x128xf32>
    %159 = arith.mulf %158, %143 : vector<8x128xf32>
    %c8 = arith.constant 8 : index
    %c0_56 = arith.constant 0 : index
    %c0_57 = arith.constant 0 : index
    %160 = vector.load %arg3[%c8, %c0_56, %c0_57] : memref<16x8x128xf32, #tpu.memory_space<vmem>>, vector<1x8x128xf32>
    %161 = vector.shape_cast %160 : vector<1x8x128xf32> to vector<8x128xf32>
    %162 = vector.shape_cast %159 : vector<8x128xf32> to vector<1x8x128xf32>
    tpu.vector_store %arg3[%c8, %c0_56, %c0_57], %162 {strides = array<i32>} : memref<16x8x128xf32, #tpu.memory_space<vmem>>, vector<1x8x128xf32>,
    %cst_58 = arith.constant 0.109950386 : f32
    %163 = vector.broadcast %cst_58 : f32 to vector<8x128xf32>
    %164 = arith.mulf %163, %3 : vector<8x128xf32>
    %cst_59 = arith.constant 9.09501171 : f32
    %165 = vector.broadcast %cst_59 : f32 to vector<8x128xf32>
    %166 = arith.mulf %165, %0 : vector<8x128xf32>
    %167 = math.sin %166 : vector<8x128xf32>
    %168 = arith.mulf %167, %164 : vector<8x128xf32>
    %169 = math.cos %166 : vector<8x128xf32>
    %170 = arith.subf %168, %169 : vector<8x128xf32>
    %171 = arith.mulf %170, %164 : vector<8x128xf32>
    %cst_60 = arith.constant 3.000000e+00 : f32
    %172 = vector.broadcast %cst_60 : f32 to vector<8x128xf32>
    %173 = arith.mulf %172, %164 : vector<8x128xf32>
    %174 = arith.mulf %173, %171 : vector<8x128xf32>
    %175 = arith.subf %174, %168 : vector<8x128xf32>
    %cst_61 = arith.constant 8.26436805 : f32
    %176 = vector.broadcast %cst_61 : f32 to vector<8x128xf32>
    %177 = arith.mulf %176, %175 : vector<8x128xf32>
    %178 = arith.mulf %177, %143 : vector<8x128xf32>
    %c9 = arith.constant 9 : index
    %c0_62 = arith.constant 0 : index
    %c0_63 = arith.constant 0 : index
    %179 = vector.load %arg3[%c9, %c0_62, %c0_63] : memref<16x8x128xf32, #tpu.memory_space<vmem>>, vector<1x8x128xf32>
    %180 = vector.shape_cast %179 : vector<1x8x128xf32> to vector<8x128xf32>
    %181 = vector.shape_cast %178 : vector<8x128xf32> to vector<1x8x128xf32>
    tpu.vector_store %arg3[%c9, %c0_62, %c0_63], %181 {strides = array<i32>} : memref<16x8x128xf32, #tpu.memory_space<vmem>>, vector<1x8x128xf32>,
    %cst_64 = arith.constant 0.0811494589 : f32
    %182 = vector.broadcast %cst_64 : f32 to vector<8x128xf32>
    %183 = arith.mulf %182, %3 : vector<8x128xf32>
    %cst_65 = arith.constant 12.3229408 : f32
    %184 = vector.broadcast %cst_65 : f32 to vector<8x128xf32>
    %185 = arith.mulf %184, %0 : vector<8x128xf32>
    %186 = math.sin %185 : vector<8x128xf32>
    %187 = arith.mulf %186, %183 : vector<8x128xf32>
    %188 = math.cos %185 : vector<8x128xf32>
    %189 = arith.subf %187, %188 : vector<8x128xf32>
    %190 = arith.mulf %189, %183 : vector<8x128xf32>
    %cst_66 = arith.constant 3.000000e+00 : f32
    %191 = vector.broadcast %cst_66 : f32 to vector<8x128xf32>
    %192 = arith.mulf %191, %183 : vector<8x128xf32>
    %193 = arith.mulf %192, %190 : vector<8x128xf32>
    %194 = arith.subf %193, %187 : vector<8x128xf32>
    %cst_67 = arith.constant 11.1030064 : f32
    %195 = vector.broadcast %cst_67 : f32 to vector<8x128xf32>
    %196 = arith.mulf %195, %194 : vector<8x128xf32>
    %197 = arith.mulf %196, %143 : vector<8x128xf32>
    %c10 = arith.constant 10 : index
    %c0_68 = arith.constant 0 : index
    %c0_69 = arith.constant 0 : index
    %198 = vector.load %arg3[%c10, %c0_68, %c0_69] : memref<16x8x128xf32, #tpu.memory_space<vmem>>, vector<1x8x128xf32>
    %199 = vector.shape_cast %198 : vector<1x8x128xf32> to vector<8x128xf32>
    %200 = vector.shape_cast %197 : vector<8x128xf32> to vector<1x8x128xf32>
    tpu.vector_store %arg3[%c10, %c0_68, %c0_69], %200 {strides = array<i32>} : memref<16x8x128xf32, #tpu.memory_space<vmem>>, vector<1x8x128xf32>,
    %cst_70 = arith.constant 0.0644554049 : f32
    %201 = vector.broadcast %cst_70 : f32 to vector<8x128xf32>
    %202 = arith.mulf %201, %3 : vector<8x128xf32>
    %cst_71 = arith.constant 15.5146027 : f32
    %203 = vector.broadcast %cst_71 : f32 to vector<8x128xf32>
    %204 = arith.mulf %203, %0 : vector<8x128xf32>
    %205 = math.sin %204 : vector<8x128xf32>
    %206 = arith.mulf %205, %202 : vector<8x128xf32>
    %207 = math.cos %204 : vector<8x128xf32>
    %208 = arith.subf %206, %207 : vector<8x128xf32>
    %209 = arith.mulf %208, %202 : vector<8x128xf32>
    %cst_72 = arith.constant 3.000000e+00 : f32
    %210 = vector.broadcast %cst_72 : f32 to vector<8x128xf32>
    %211 = arith.mulf %210, %202 : vector<8x128xf32>
    %212 = arith.mulf %211, %209 : vector<8x128xf32>
    %213 = arith.subf %212, %206 : vector<8x128xf32>
    %cst_73 = arith.constant 13.9270372 : f32
    %214 = vector.broadcast %cst_73 : f32 to vector<8x128xf32>
    %215 = arith.mulf %214, %213 : vector<8x128xf32>
    %216 = arith.mulf %215, %143 : vector<8x128xf32>
    %c11 = arith.constant 11 : index
    %c0_74 = arith.constant 0 : index
    %c0_75 = arith.constant 0 : index
    %217 = vector.load %arg3[%c11, %c0_74, %c0_75] : memref<16x8x128xf32, #tpu.memory_space<vmem>>, vector<1x8x128xf32>
    %218 = vector.shape_cast %217 : vector<1x8x128xf32> to vector<8x128xf32>
    %219 = vector.shape_cast %216 : vector<8x128xf32> to vector<1x8x128xf32>
    tpu.vector_store %arg3[%c11, %c0_74, %c0_75], %219 {strides = array<i32>} : memref<16x8x128xf32, #tpu.memory_space<vmem>>, vector<1x8x128xf32>,
    %cst_76 = arith.constant 0.000000e+00 : f32
    %220 = vector.broadcast %cst_76 : f32 to vector<8x128xf32>
    %c12 = arith.constant 12 : index
    %c0_77 = arith.constant 0 : index
    %c0_78 = arith.constant 0 : index
    %221 = vector.load %arg3[%c12, %c0_77, %c0_78] : memref<16x8x128xf32, #tpu.memory_space<vmem>>, vector<1x8x128xf32>
    %222 = vector.shape_cast %221 : vector<1x8x128xf32> to vector<8x128xf32>
    %223 = vector.shape_cast %220 : vector<8x128xf32> to vector<1x8x128xf32>
    tpu.vector_store %arg3[%c12, %c0_77, %c0_78], %223 {strides = array<i32>} : memref<16x8x128xf32, #tpu.memory_space<vmem>>, vector<1x8x128xf32>,
    %c13 = arith.constant 13 : index
    %c0_79 = arith.constant 0 : index
    %c0_80 = arith.constant 0 : index
    %224 = vector.load %arg3[%c13, %c0_79, %c0_80] : memref<16x8x128xf32, #tpu.memory_space<vmem>>, vector<1x8x128xf32>
    %225 = vector.shape_cast %224 : vector<1x8x128xf32> to vector<8x128xf32>
    %226 = vector.shape_cast %220 : vector<8x128xf32> to vector<1x8x128xf32>
    tpu.vector_store %arg3[%c13, %c0_79, %c0_80], %226 {strides = array<i32>} : memref<16x8x128xf32, #tpu.memory_space<vmem>>, vector<1x8x128xf32>,
    %c14 = arith.constant 14 : index
    %c0_81 = arith.constant 0 : index
    %c0_82 = arith.constant 0 : index
    %227 = vector.load %arg3[%c14, %c0_81, %c0_82] : memref<16x8x128xf32, #tpu.memory_space<vmem>>, vector<1x8x128xf32>
    %228 = vector.shape_cast %227 : vector<1x8x128xf32> to vector<8x128xf32>
    %229 = vector.shape_cast %220 : vector<8x128xf32> to vector<1x8x128xf32>
    tpu.vector_store %arg3[%c14, %c0_81, %c0_82], %229 {strides = array<i32>} : memref<16x8x128xf32, #tpu.memory_space<vmem>>, vector<1x8x128xf32>,
    %c15 = arith.constant 15 : index
    %c0_83 = arith.constant 0 : index
    %c0_84 = arith.constant 0 : index
    %230 = vector.load %arg3[%c15, %c0_83, %c0_84] : memref<16x8x128xf32, #tpu.memory_space<vmem>>, vector<1x8x128xf32>
    %231 = vector.shape_cast %230 : vector<1x8x128xf32> to vector<8x128xf32>
    %232 = vector.shape_cast %220 : vector<8x128xf32> to vector<1x8x128xf32>
    tpu.vector_store %arg3[%c15, %c0_83, %c0_84], %232 {strides = array<i32>} : memref<16x8x128xf32, #tpu.memory_space<vmem>>, vector<1x8x128xf32>,
    return
  }
  func.func @transform_0(%arg0: i32) -> (i32, i32) {
    %c0_i32 = arith.constant 0 : i32
    %c0_i32_0 = arith.constant 0 : i32
    return %arg0, %c0_i32 : i32, i32
  }
  func.func @transform_1(%arg0: i32) -> (i32, i32) {
    %c0_i32 = arith.constant 0 : i32
    %c0_i32_0 = arith.constant 0 : i32
    return %arg0, %c0_i32 : i32, i32
  }
  func.func @transform_2(%arg0: i32) -> (i32, i32, i32) {
    %c0_i32 = arith.constant 0 : i32
    %c0_i32_0 = arith.constant 0 : i32
    %c0_i32_1 = arith.constant 0 : i32
    return %c0_i32, %arg0, %c0_i32_0 : i32, i32, i32
  }
}

</mosaic_0001>

<llo_original>
// kernel: tpu_custom_call.1
$region0: #{tpu_custom_call.1}
  #allocation0 [shape = 'u32[]', space=smem, size = 0x4, offset = 0x4, fixed_abs, tag = 'smem constant byte address 0x4 - core index']
  #allocation1 [shape = 'u32[144,128]{1,0:T(1,128)}', space=vmem, size = 0x12000, scoped, tag = 'internal scratch']
  %s0 = inlined_call_operand.hbm [shape: f32[8,128], index: 0, kind: input, shape index: {}]
  %s1 = inlined_call_operand.hbm [shape: f32[8,128], index: 1, kind: input, shape index: {}]
  %s2 = inlined_call_operand.hbm [shape: f32[16,8,128], index: 2, kind: output, shape index: {}]
  %s3 = sld [smem:[#allocation0]]
  $region26: #{tpu_custom_call.1} parent=0
    _
  %s5 = ssub.s32 1, %s3
  %s6 = scalar_select 0, %s5, %s3
  $region1: #{tpu_custom_call.1} parent=0
    #allocation2 [shape = 'u8[4096]{0}', space=vmem, size = 0x1000, scoped, tag = 'input window, operand 0, single buffered']
    #allocation3 [shape = 's32[1]{0}', space=sflag, size = 0x4, scoped, tag = 'scoped memory for tpu_custom_call.1']
    #allocation4 [shape = 's32[1]{0}', space=sflag, size = 0x4, scoped, tag = 'scoped memory for tpu_custom_call.1']
    #allocation5 [shape = 'u8[4096]{0}', space=vmem, size = 0x1000, scoped, tag = 'input window, operand 1, single buffered']
    #allocation6 [shape = 's32[1]{0}', space=sflag, size = 0x4, scoped, tag = 'scoped memory for tpu_custom_call.1']
    #allocation7 [shape = 'u8[65536]{0}', space=vmem, size = 0x10000, scoped, tag = 'output window, operand 0, single buffered']
    %7 = vsyncpa [#allocation3], 0
    %8 = vsyncpa [#allocation6], 0
    %9 = vsyncpa [#allocation4], 0
    // Predicated region
    $region2: #{tpu_custom_call.1} parent=1 // pred_check
      _
    $region3: #{tpu_custom_call.1} parent=1 // pred_check_branch
      %11 = sbr.rel (0) target = $region5
    $region4: #{tpu_custom_call.1} parent=1 // pred_region
      %s13 = ssub.s32 128, 128
      %14 = vsyncadd [#allocation3], %s13
      %s16 = sshll.u32 [#allocation2], 4
      %s17 = int_to_ptr.vmem [resolvable:$true] %s16
      %19 = dma.hbm_to_vmem [thread:$0]  %s0, 128, %s17, [#allocation3]
    $region5: #{tpu_custom_call.1} parent=1 // pred_fallthru
      _
    // Predicated region
    $region6: #{tpu_custom_call.1} parent=1 // pred_check
      _
    $region7: #{tpu_custom_call.1} parent=1 // pred_check_branch
      %21 = sbr.rel (0) target = $region9
    $region8: #{tpu_custom_call.1} parent=1 // pred_region
      %s23 = ssub.s32 128, 128
      %24 = vsyncadd [#allocation6], %s23
      %s26 = sshll.u32 [#allocation5], 4
      %s27 = int_to_ptr.vmem [resolvable:$true] %s26
      %29 = dma.hbm_to_vmem [thread:$0]  %s1, 128, %s27, [#allocation6]
    $region9: #{tpu_custom_call.1} parent=1 // pred_fallthru
      _
    // Predicated region
    $region10: #{tpu_custom_call.1} parent=1 // pred_check
      _
    $region11: #{tpu_custom_call.1} parent=1 // pred_check_branch
      %31 = sbr.rel (0) target = $region13
    $region12: #{tpu_custom_call.1} parent=1 // pred_region
      %32 = dma.done [#allocation3], 128
    $region13: #{tpu_custom_call.1} parent=1 // pred_fallthru
      _
    // Predicated region
    $region14: #{tpu_custom_call.1} parent=1 // pred_check
      _
    $region15: #{tpu_custom_call.1} parent=1 // pred_check_branch
      %34 = sbr.rel (0) target = $region17
    $region16: #{tpu_custom_call.1} parent=1 // pred_region
      %35 = dma.done [#allocation6], 128
    $region17: #{tpu_custom_call.1} parent=1 // pred_fallthru
      _
    %v36 = vld [vmem:[#allocation2] sm:$0xff]
    %v37 = vld [vmem:[#allocation5] sm:$0xff]
    %v38 = vrcp.pop %v36
    %v39 = vmul.f32 1.0, %v38
    %v40 = vmul.f32 %v36, %v36
    %v41 = vmul.f32 %v40, %v40
    %v42 = vmul.f32 %v36, %v41
    %v43 = vmul.f32 %v42, %v36
    %v44 = vmul.f32 %v43, %v36
    %v45 = vmul.f32 %v42, -28.0
    %v46 = vadd.f32 %v39, %v45
    %v47 = vmul.f32 %v43, 48.0
    %v48 = vadd.f32 %v46, %v47
    %v49 = vmul.f32 %v44, -21.0
    %v50 = vadd.f32 %v48, %v49
    %vm51 = vcmp.lt.f32.partialorder %v36, 1.0
    %v52 = vsel %vm51, 1, 0
    %v53 = vcvt.s32.f32 %v52
    %v54 = vmul.f32 %v50, %v53
    %v55 = vand.u32 2147483647, %v37
    %vm56 = vcmp.le.f32.partialorder %v55, 0.7853982
    %vm57 = vcmp.lt.s32.totalorder %v37, 0
    %v58 = vand.u32 %v37, 2139095040
    %v59 = vshrl.u32 %v58, 23
    %v60 = vsub.s32 %v59, 127
    %v61 = vand.u32 2147483647, %v37
    %v62 = vand.u32 %v61, 8388607
    %v63 = vor.u32 %v62, 8388608
    %v64 = vsub.s32 0, %v63
    %v65 = vadd.s32 %v60, 1
    %vm66 = vcmp.gt.s32.totalorder %v65, 0
    %v67 = vsel %vm66, %v65, 0
    %v68 = vshrl.u32 %v67, 5
    %v69 = vand.u32 %v67, 31
    %v70 = vsub.s32 32, %v69
    %v71 = vshrl.u32 683565275, %v70
    %v72 = vshll.u32 683565275, %v69
    %v73 = vshrl.u32 2475754826, %v70
    %v74 = vor.u32 %v72, %v73
    %v75 = vshll.u32 2475754826, %v69
    %v76 = vshrl.u32 2131351028, %v70
    %v77 = vor.u32 %v75, %v76
    %v78 = vshll.u32 2131351028, %v69
    %v79 = vshrl.u32 2102212464, %v70
    %v80 = vor.u32 %v78, %v79
    %v81 = vshll.u32 2102212464, %v69
    %v82 = vshrl.u32 920167782, %v70
    %v83 = vor.u32 %v81, %v82
    %v84 = vshll.u32 920167782, %v69
    %v85 = vshrl.u32 1326507024, %v70
    %v86 = vor.u32 %v84, %v85
    %vm87 = vcmp.lt.s32.totalorder %v68, 1
    %vm88 = vcmp.lt.s32.totalorder %v68, 2
    %vm89 = vcmp.lt.s32.totalorder %v68, 3
    %vm90 = vcmp.lt.s32.totalorder %v68, 4
    %v91 = vsel %vm87, %v71, %v74
    %v92 = vsel %vm90, %v80, 2102212464
    %v93 = vsel %vm89, %v77, %v92
    %v94 = vsel %vm88, %v91, %v93
    %v95 = vsel %vm87, %v74, %v77
    %v96 = vsel %vm90, %v83, 920167782
    %v97 = vsel %vm89, %v80, %v96
    %v98 = vsel %vm88, %v95, %v97
    %v99 = vsel %vm87, %v77, %v80
    %v100 = vsel %vm90, %v86, 1326507024
    %v101 = vsel %vm89, %v83, %v100
    %v102 = vsel %vm88, %v99, %v101
    %v103 = vshll.u32 %v63, 8
    %v104 = vmul.u32.u64.compose %v103, %v102
    %v105 = vextract.low.u32 %v104
    %v106 = vextract.high.u32 %v104
    %v107 = vmul.u32.u64.compose %v103, %v98
    %v108 = vextract.low.u32 %v107
    %v109 = vextract.high.u32 %v107
    %v110 = vmul.u32 %v103, %v94
    %v111 = vadd.s32 %v106, %v108
    %vm112 = vc.u32 %v106, %v108
    %v113 = vadd.s32 %v109, 1
    %v114 = vsel %vm112, %v113, %v109
    %v115 = vadd.s32 %v110, %v114
    %v116 = vadd.s32 %v115, 536870912
    %v117 = vshrl.u32 %v116, 30
    %v118 = vshll.u32 %v117, 30
    %v119 = vsub.s32 %v115, %v118
    %vm120 = vcmp.lt.s32.totalorder %v119, 0
    %v121 = vsub.s32 0, %v119
    %v122 = vsel %vm120, %v121, %v119
    %v123 = vclz %v122
    %v124 = vsub.s32 %v123, 2
    %vm125 = vcmp.gt.s32.totalorder 0, %v124
    %v126 = vsel %vm125, 0, %v124
    %v127 = vsub.s32 32, %v126
    %v128 = vshll.u32 %v119, %v126
    %v129 = vshrl.u32 %v111, %v127
    %v130 = vor.u32 %v128, %v129
    %v131 = vsub.s32 4294967266, %v126
    %v132 = vadd.s32 %v131, 127
    %v133 = vshll.u32 %v132, 23
    %v134 = vor.u32 4788187, %v133
    %v135 = vand.u32 2147483647, %v134
    %v137 = vcvt.s32.f32 %v130
    %v138 = vmul.f32 %v137, %v135
    %v139 = vxor.u32 %v138, 2147483648
    %v140 = vsel %vm57, %v139, %v138
    %v141 = vsub.s32 4, %v117
    %v142 = vsel %vm57, %v141, %v117
    %v143 = vsel %vm56, %v37, %v140
    %v144 = vsel %vm56, 0, %v142
    %v145 = vcosq.f32.pop %v143
    %v146 = vsinq.f32.pop %v143
    %vm147 = vweird.f32 %v37
    %v148 = vand.u32 %v144, 3
    %vm149 = vcmp.lt.s32.totalorder %v148, 2
    %vm150 = vcmp.eq.s32.totalorder %v148, 0
    %v151 = vxor.u32 %v146, 2147483648
    %v152 = vsel %vm150, %v145, %v151
    %vm153 = vcmp.eq.s32.totalorder %v148, 2
    %v154 = vxor.u32 %v145, 2147483648
    %v155 = vsel %vm153, %v154, %v146
    %v156 = vsel %vm149, %v152, %v155
    %v157 = vsel %vm147, nan, %v156
    %v158 = vmul.f32 %v157, 3.0
    %v159 = vmul.f32 %v158, %v157
    %v160 = vsub.f32 %v159, 1.0
    %v161 = vmul.f32 %v160, 0.5
    %v162 = vmul.f32 %v39, 0.31830987
    %v163 = vmul.f32 %v36, 3.1415927
    %v164 = vand.u32 2147483647, %v163
    %vm165 = vcmp.le.f32.partialorder %v164, 0.7853982
    %vm166 = vcmp.lt.s32.totalorder %v163, 0
    %v167 = vand.u32 %v163, 2139095040
    %v168 = vshrl.u32 %v167, 23
    %v169 = vsub.s32 %v168, 127
    %v170 = vand.u32 2147483647, %v163
    %v171 = vand.u32 %v170, 8388607
    %v172 = vor.u32 %v171, 8388608
    %v173 = vsub.s32 0, %v172
    %v174 = vadd.s32 %v169, 1
    %vm175 = vcmp.gt.s32.totalorder %v174, 0
    %v176 = vsel %vm175, %v174, 0
    %v177 = vshrl.u32 %v176, 5
    %v178 = vand.u32 %v176, 31
    %v179 = vsub.s32 32, %v178
    %v180 = vshrl.u32 683565275, %v179
    %v181 = vshll.u32 683565275, %v178
    %v182 = vshrl.u32 2475754826, %v179
    %v183 = vor.u32 %v181, %v182
    %v184 = vshll.u32 2475754826, %v178
    %v185 = vshrl.u32 2131351028, %v179
    %v186 = vor.u32 %v184, %v185
    %v187 = vshll.u32 2131351028, %v178
    %v188 = vshrl.u32 2102212464, %v179
    %v189 = vor.u32 %v187, %v188
    %v190 = vshll.u32 2102212464, %v178
    %v191 = vshrl.u32 920167782, %v179
    %v192 = vor.u32 %v190, %v191
    %v193 = vshll.u32 920167782, %v178
    %v194 = vshrl.u32 1326507024, %v179
    %v195 = vor.u32 %v193, %v194
    %vm196 = vcmp.lt.s32.totalorder %v177, 1
    %vm197 = vcmp.lt.s32.totalorder %v177, 2
    %vm198 = vcmp.lt.s32.totalorder %v177, 3
    %vm199 = vcmp.lt.s32.totalorder %v177, 4
    %v200 = vsel %vm196, %v180, %v183
    %v201 = vsel %vm199, %v189, 2102212464
    %v202 = vsel %vm198, %v186, %v201
    %v203 = vsel %vm197, %v200, %v202
    %v204 = vsel %vm196, %v183, %v186
    %v205 = vsel %vm199, %v192, 920167782
    %v206 = vsel %vm198, %v189, %v205
    %v207 = vsel %vm197, %v204, %v206
    %v208 = vsel %vm196, %v186, %v189
    %v209 = vsel %vm199, %v195, 1326507024
    %v210 = vsel %vm198, %v192, %v209
    %v211 = vsel %vm197, %v208, %v210
    %v212 = vshll.u32 %v172, 8
    %v213 = vmul.u32.u64.compose %v212, %v211
    %v214 = vextract.low.u32 %v213
    %v215 = vextract.high.u32 %v213
    %v216 = vmul.u32.u64.compose %v212, %v207
    %v217 = vextract.low.u32 %v216
    %v218 = vextract.high.u32 %v216
    %v219 = vmul.u32 %v212, %v203
    %v220 = vadd.s32 %v215, %v217
    %vm221 = vc.u32 %v215, %v217
    %v222 = vadd.s32 %v218, 1
    %v223 = vsel %vm221, %v222, %v218
    %v224 = vadd.s32 %v219, %v223
    %v225 = vadd.s32 %v224, 536870912
    %v226 = vshrl.u32 %v225, 30
    %v227 = vshll.u32 %v226, 30
    %v228 = vsub.s32 %v224, %v227
    %vm229 = vcmp.lt.s32.totalorder %v228, 0
    %v230 = vsub.s32 0, %v228
    %v231 = vsel %vm229, %v230, %v228
    %v232 = vclz %v231
    %v233 = vsub.s32 %v232, 2
    %vm234 = vcmp.gt.s32.totalorder 0, %v233
    %v235 = vsel %vm234, 0, %v233
    %v236 = vsub.s32 32, %v235
    %v237 = vshll.u32 %v228, %v235
    %v238 = vshrl.u32 %v220, %v236
    %v239 = vor.u32 %v237, %v238
    %v240 = vsub.s32 4294967266, %v235
    %v241 = vadd.s32 %v240, 127
    %v242 = vshll.u32 %v241, 23
    %v243 = vor.u32 4788187, %v242
    %v244 = vand.u32 2147483647, %v243
    %v246 = vcvt.s32.f32 %v239
    %v247 = vmul.f32 %v246, %v244
    %v248 = vxor.u32 %v247, 2147483648
    %v249 = vsel %vm166, %v248, %v247
    %v250 = vsub.s32 4, %v226
    %v251 = vsel %vm166, %v250, %v226
    %v252 = vsel %vm165, %v163, %v249
    %v253 = vsel %vm165, 0, %v251
    %v254 = vcosq.f32.pop %v252
    %v255 = vsinq.f32.pop %v252
    %vm256 = vweird.f32 %v163
    %v257 = vadd.s32 %v253, 3
    %v258 = vand.u32 %v257, 3
    %vm259 = vcmp.lt.s32.totalorder %v258, 2
    %vm260 = vcmp.eq.s32.totalorder %v258, 0
    %v261 = vxor.u32 %v255, 2147483648
    %v262 = vsel %vm260, %v254, %v261
    %vm263 = vcmp.eq.s32.totalorder %v258, 2
    %v264 = vxor.u32 %v254, 2147483648
    %v265 = vsel %vm263, %v264, %v255
    %v266 = vsel %vm259, %v262, %v265
    %v267 = vsel %vm256, nan, %v266
    %v268 = vmul.f32 %v267, %v162
    %v269 = vmul.f32 %v268, 1.2533141
    %v270 = vmul.f32 %v269, %v54
    %271 = vst [vmem:[#allocation7] sm:$0xff] %v270
    %v272 = vmul.f32 %v39, 0.15915494
    %v273 = vmul.f32 %v36, 6.2831855
    %v274 = vand.u32 2147483647, %v273
    %vm275 = vcmp.le.f32.partialorder %v274, 0.7853982
    %vm276 = vcmp.lt.s32.totalorder %v273, 0
    %v277 = vand.u32 %v273, 2139095040
    %v278 = vshrl.u32 %v277, 23
    %v279 = vsub.s32 %v278, 127
    %v280 = vand.u32 2147483647, %v273
    %v281 = vand.u32 %v280, 8388607
    %v282 = vor.u32 %v281, 8388608
    %v283 = vsub.s32 0, %v282
    %v284 = vadd.s32 %v279, 1
    %vm285 = vcmp.gt.s32.totalorder %v284, 0
    %v286 = vsel %vm285, %v284, 0
    %v287 = vshrl.u32 %v286, 5
    %v288 = vand.u32 %v286, 31
    %v289 = vsub.s32 32, %v288
    %v290 = vshrl.u32 683565275, %v289
    %v291 = vshll.u32 683565275, %v288
    %v292 = vshrl.u32 2475754826, %v289
    %v293 = vor.u32 %v291, %v292
    %v294 = vshll.u32 2475754826, %v288
    %v295 = vshrl.u32 2131351028, %v289
    %v296 = vor.u32 %v294, %v295
    %v297 = vshll.u32 2131351028, %v288
    %v298 = vshrl.u32 2102212464, %v289
    %v299 = vor.u32 %v297, %v298
    %v300 = vshll.u32 2102212464, %v288
    %v301 = vshrl.u32 920167782, %v289
    %v302 = vor.u32 %v300, %v301
    %v303 = vshll.u32 920167782, %v288
    %v304 = vshrl.u32 1326507024, %v289
    %v305 = vor.u32 %v303, %v304
    %vm306 = vcmp.lt.s32.totalorder %v287, 1
    %vm307 = vcmp.lt.s32.totalorder %v287, 2
    %vm308 = vcmp.lt.s32.totalorder %v287, 3
    %vm309 = vcmp.lt.s32.totalorder %v287, 4
    %v310 = vsel %vm306, %v290, %v293
    %v311 = vsel %vm309, %v299, 2102212464
    %v312 = vsel %vm308, %v296, %v311
    %v313 = vsel %vm307, %v310, %v312
    %v314 = vsel %vm306, %v293, %v296
    %v315 = vsel %vm309, %v302, 920167782
    %v316 = vsel %vm308, %v299, %v315
    %v317 = vsel %vm307, %v314, %v316
    %v318 = vsel %vm306, %v296, %v299
    %v319 = vsel %vm309, %v305, 1326507024
    %v320 = vsel %vm308, %v302, %v319
    %v321 = vsel %vm307, %v318, %v320
    %v322 = vshll.u32 %v282, 8
    %v323 = vmul.u32.u64.compose %v322, %v321
    %v324 = vextract.low.u32 %v323
    %v325 = vextract.high.u32 %v323
    %v326 = vmul.u32.u64.compose %v322, %v317
    %v327 = vextract.low.u32 %v326
    %v328 = vextract.high.u32 %v326
    %v329 = vmul.u32 %v322, %v313
    %v330 = vadd.s32 %v325, %v327
    %vm331 = vc.u32 %v325, %v327
    %v332 = vadd.s32 %v328, 1
    %v333 = vsel %vm331, %v332, %v328
    %v334 = vadd.s32 %v329, %v333
    %v335 = vadd.s32 %v334, 536870912
    %v336 = vshrl.u32 %v335, 30
    %v337 = vshll.u32 %v336, 30
    %v338 = vsub.s32 %v334, %v337
    %vm339 = vcmp.lt.s32.totalorder %v338, 0
    %v340 = vsub.s32 0, %v338
    %v341 = vsel %vm339, %v340, %v338
    %v342 = vclz %v341
    %v343 = vsub.s32 %v342, 2
    %vm344 = vcmp.gt.s32.totalorder 0, %v343
    %v345 = vsel %vm344, 0, %v343
    %v346 = vsub.s32 32, %v345
    %v347 = vshll.u32 %v338, %v345
    %v348 = vshrl.u32 %v330, %v346
    %v349 = vor.u32 %v347, %v348
    %v350 = vsub.s32 4294967266, %v345
    %v351 = vadd.s32 %v350, 127
    %v352 = vshll.u32 %v351, 23
    %v353 = vor.u32 4788187, %v352
    %v354 = vand.u32 2147483647, %v353
    %v356 = vcvt.s32.f32 %v349
    %v357 = vmul.f32 %v356, %v354
    %v358 = vxor.u32 %v357, 2147483648
    %v359 = vsel %vm276, %v358, %v357
    %v360 = vsub.s32 4, %v336
    %v361 = vsel %vm276, %v360, %v336
    %v362 = vsel %vm275, %v273, %v359
    %v363 = vsel %vm275, 0, %v361
    %v364 = vcosq.f32.pop %v362
    %v365 = vsinq.f32.pop %v362
    %vm366 = vweird.f32 %v273
    %v367 = vadd.s32 %v363, 3
    %v368 = vand.u32 %v367, 3
    %vm369 = vcmp.lt.s32.totalorder %v368, 2
    %vm370 = vcmp.eq.s32.totalorder %v368, 0
    %v371 = vxor.u32 %v365, 2147483648
    %v372 = vsel %vm370, %v364, %v371
    %vm373 = vcmp.eq.s32.totalorder %v368, 2
    %v374 = vxor.u32 %v364, 2147483648
    %v375 = vsel %vm373, %v374, %v365
    %v376 = vsel %vm369, %v372, %v375
    %v377 = vsel %vm366, nan, %v376
    %v378 = vmul.f32 %v377, %v272
    %v379 = vmul.f32 %v378, 2.5066283
    %v380 = vmul.f32 %v379, %v54
    %s381 = scalar_lea.vmem [#allocation7], 8
    %382 = vst [vmem:[%s381] sm:$0xff] %v380
    %v383 = vmul.f32 %v39, 0.10610329
    %v384 = vmul.f32 %v36, 9.424778
    %v385 = vand.u32 2147483647, %v384
    %vm386 = vcmp.le.f32.partialorder %v385, 0.7853982
    %vm387 = vcmp.lt.s32.totalorder %v384, 0
    %v388 = vand.u32 %v384, 2139095040
    %v389 = vshrl.u32 %v388, 23
    %v390 = vsub.s32 %v389, 127
    %v391 = vand.u32 2147483647, %v384
    %v392 = vand.u32 %v391, 8388607
    %v393 = vor.u32 %v392, 8388608
    %v394 = vsub.s32 0, %v393
    %v395 = vadd.s32 %v390, 1
    %vm396 = vcmp.gt.s32.totalorder %v395, 0
    %v397 = vsel %vm396, %v395, 0
    %v398 = vshrl.u32 %v397, 5
    %v399 = vand.u32 %v397, 31
    %v400 = vsub.s32 32, %v399
    %v401 = vshrl.u32 683565275, %v400
    %v402 = vshll.u32 683565275, %v399
    %v403 = vshrl.u32 2475754826, %v400
    %v404 = vor.u32 %v402, %v403
    %v405 = vshll.u32 2475754826, %v399
    %v406 = vshrl.u32 2131351028, %v400
    %v407 = vor.u32 %v405, %v406
    %v408 = vshll.u32 2131351028, %v399
    %v409 = vshrl.u32 2102212464, %v400
    %v410 = vor.u32 %v408, %v409
    %v411 = vshll.u32 2102212464, %v399
    %v412 = vshrl.u32 920167782, %v400
    %v413 = vor.u32 %v411, %v412
    %v414 = vshll.u32 920167782, %v399
    %v415 = vshrl.u32 1326507024, %v400
    %v416 = vor.u32 %v414, %v415
    %vm417 = vcmp.lt.s32.totalorder %v398, 1
    %vm418 = vcmp.lt.s32.totalorder %v398, 2
    %vm419 = vcmp.lt.s32.totalorder %v398, 3
    %vm420 = vcmp.lt.s32.totalorder %v398, 4
    %v421 = vsel %vm417, %v401, %v404
    %v422 = vsel %vm420, %v410, 2102212464
    %v423 = vsel %vm419, %v407, %v422
    %v424 = vsel %vm418, %v421, %v423
    %v425 = vsel %vm417, %v404, %v407
    %v426 = vsel %vm420, %v413, 920167782
    %v427 = vsel %vm419, %v410, %v426
    %v428 = vsel %vm418, %v425, %v427
    %v429 = vsel %vm417, %v407, %v410
    %v430 = vsel %vm420, %v416, 1326507024
    %v431 = vsel %vm419, %v413, %v430
    %v432 = vsel %vm418, %v429, %v431
    %v433 = vshll.u32 %v393, 8
    %v434 = vmul.u32.u64.compose %v433, %v432
    %v435 = vextract.low.u32 %v434
    %v436 = vextract.high.u32 %v434
    %v437 = vmul.u32.u64.compose %v433, %v428
    %v438 = vextract.low.u32 %v437
    %v439 = vextract.high.u32 %v437
    %v440 = vmul.u32 %v433, %v424
    %v441 = vadd.s32 %v436, %v438
    %vm442 = vc.u32 %v436, %v438
    %v443 = vadd.s32 %v439, 1
    %v444 = vsel %vm442, %v443, %v439
    %v445 = vadd.s32 %v440, %v444
    %v446 = vadd.s32 %v445, 536870912
    %v447 = vshrl.u32 %v446, 30
    %v448 = vshll.u32 %v447, 30
    %v449 = vsub.s32 %v445, %v448
    %vm450 = vcmp.lt.s32.totalorder %v449, 0
    %v451 = vsub.s32 0, %v449
    %v452 = vsel %vm450, %v451, %v449
    %v453 = vclz %v452
    %v454 = vsub.s32 %v453, 2
    %vm455 = vcmp.gt.s32.totalorder 0, %v454
    %v456 = vsel %vm455, 0, %v454
    %v457 = vsub.s32 32, %v456
    %v458 = vshll.u32 %v449, %v456
    %v459 = vshrl.u32 %v441, %v457
    %v460 = vor.u32 %v458, %v459
    %v461 = vsub.s32 4294967266, %v456
    %v462 = vadd.s32 %v461, 127
    %v463 = vshll.u32 %v462, 23
    %v464 = vor.u32 4788187, %v463
    %v465 = vand.u32 2147483647, %v464
    %v467 = vcvt.s32.f32 %v460
    %v468 = vmul.f32 %v467, %v465
    %v469 = vxor.u32 %v468, 2147483648
    %v470 = vsel %vm387, %v469, %v468
    %v471 = vsub.s32 4, %v447
    %v472 = vsel %vm387, %v471, %v447
    %v473 = vsel %vm386, %v384, %v470
    %v474 = vsel %vm386, 0, %v472
    %v475 = vcosq.f32.pop %v473
    %v476 = vsinq.f32.pop %v473
    %vm477 = vweird.f32 %v384
    %v478 = vadd.s32 %v474, 3
    %v479 = vand.u32 %v478, 3
    %vm480 = vcmp.lt.s32.totalorder %v479, 2
    %vm481 = vcmp.eq.s32.totalorder %v479, 0
    %v482 = vxor.u32 %v476, 2147483648
    %v483 = vsel %vm481, %v475, %v482
    %vm484 = vcmp.eq.s32.totalorder %v479, 2
    %v485 = vxor.u32 %v475, 2147483648
    %v486 = vsel %vm484, %v485, %v476
    %v487 = vsel %vm480, %v483, %v486
    %v488 = vsel %vm477, nan, %v487
    %v489 = vmul.f32 %v488, %v383
    %v490 = vmul.f32 %v489, 3.7599423
    %v491 = vmul.f32 %v490, %v54
    %s492 = scalar_lea.vmem [#allocation7], 16
    %493 = vst [vmem:[%s492] sm:$0xff] %v491
    %v494 = vmul.f32 %v39, 0.07957747
    %v495 = vmul.f32 %v36, 12.566371
    %v496 = vand.u32 2147483647, %v495
    %vm497 = vcmp.le.f32.partialorder %v496, 0.7853982
    %vm498 = vcmp.lt.s32.totalorder %v495, 0
    %v499 = vand.u32 %v495, 2139095040
    %v500 = vshrl.u32 %v499, 23
    %v501 = vsub.s32 %v500, 127
    %v502 = vand.u32 2147483647, %v495
    %v503 = vand.u32 %v502, 8388607
    %v504 = vor.u32 %v503, 8388608
    %v505 = vsub.s32 0, %v504
    %v506 = vadd.s32 %v501, 1
    %vm507 = vcmp.gt.s32.totalorder %v506, 0
    %v508 = vsel %vm507, %v506, 0
    %v509 = vshrl.u32 %v508, 5
    %v510 = vand.u32 %v508, 31
    %v511 = vsub.s32 32, %v510
    %v512 = vshrl.u32 683565275, %v511
    %v513 = vshll.u32 683565275, %v510
    %v514 = vshrl.u32 2475754826, %v511
    %v515 = vor.u32 %v513, %v514
    %v516 = vshll.u32 2475754826, %v510
    %v517 = vshrl.u32 2131351028, %v511
    %v518 = vor.u32 %v516, %v517
    %v519 = vshll.u32 2131351028, %v510
    %v520 = vshrl.u32 2102212464, %v511
    %v521 = vor.u32 %v519, %v520
    %v522 = vshll.u32 2102212464, %v510
    %v523 = vshrl.u32 920167782, %v511
    %v524 = vor.u32 %v522, %v523
    %v525 = vshll.u32 920167782, %v510
    %v526 = vshrl.u32 1326507024, %v511
    %v527 = vor.u32 %v525, %v526
    %vm528 = vcmp.lt.s32.totalorder %v509, 1
    %vm529 = vcmp.lt.s32.totalorder %v509, 2
    %vm530 = vcmp.lt.s32.totalorder %v509, 3
    %vm531 = vcmp.lt.s32.totalorder %v509, 4
    %v532 = vsel %vm528, %v512, %v515
    %v533 = vsel %vm531, %v521, 2102212464
    %v534 = vsel %vm530, %v518, %v533
    %v535 = vsel %vm529, %v532, %v534
    %v536 = vsel %vm528, %v515, %v518
    %v537 = vsel %vm531, %v524, 920167782
    %v538 = vsel %vm530, %v521, %v537
    %v539 = vsel %vm529, %v536, %v538
    %v540 = vsel %vm528, %v518, %v521
    %v541 = vsel %vm531, %v527, 1326507024
    %v542 = vsel %vm530, %v524, %v541
    %v543 = vsel %vm529, %v540, %v542
    %v544 = vshll.u32 %v504, 8
    %v545 = vmul.u32.u64.compose %v544, %v543
    %v546 = vextract.low.u32 %v545
    %v547 = vextract.high.u32 %v545
    %v548 = vmul.u32.u64.compose %v544, %v539
    %v549 = vextract.low.u32 %v548
    %v550 = vextract.high.u32 %v548
    %v551 = vmul.u32 %v544, %v535
    %v552 = vadd.s32 %v547, %v549
    %vm553 = vc.u32 %v547, %v549
    %v554 = vadd.s32 %v550, 1
    %v555 = vsel %vm553, %v554, %v550
    %v556 = vadd.s32 %v551, %v555
    %v557 = vadd.s32 %v556, 536870912
    %v558 = vshrl.u32 %v557, 30
    %v559 = vshll.u32 %v558, 30
    %v560 = vsub.s32 %v556, %v559
    %vm561 = vcmp.lt.s32.totalorder %v560, 0
    %v562 = vsub.s32 0, %v560
    %v563 = vsel %vm561, %v562, %v560
    %v564 = vclz %v563
    %v565 = vsub.s32 %v564, 2
    %vm566 = vcmp.gt.s32.totalorder 0, %v565
    %v567 = vsel %vm566, 0, %v565
    %v568 = vsub.s32 32, %v567
    %v569 = vshll.u32 %v560, %v567
    %v570 = vshrl.u32 %v552, %v568
    %v571 = vor.u32 %v569, %v570
    %v572 = vsub.s32 4294967266, %v567
    %v573 = vadd.s32 %v572, 127
    %v574 = vshll.u32 %v573, 23
    %v575 = vor.u32 4788187, %v574
    %v576 = vand.u32 2147483647, %v575
    %v578 = vcvt.s32.f32 %v571
    %v579 = vmul.f32 %v578, %v576
    %v580 = vxor.u32 %v579, 2147483648
    %v581 = vsel %vm498, %v580, %v579
    %v582 = vsub.s32 4, %v558
    %v583 = vsel %vm498, %v582, %v558
    %v584 = vsel %vm497, %v495, %v581
    %v585 = vsel %vm497, 0, %v583
    %v586 = vcosq.f32.pop %v584
    %v587 = vsinq.f32.pop %v584
    %vm588 = vweird.f32 %v495
    %v589 = vadd.s32 %v585, 3
    %v590 = vand.u32 %v589, 3
    %vm591 = vcmp.lt.s32.totalorder %v590, 2
    %vm592 = vcmp.eq.s32.totalorder %v590, 0
    %v593 = vxor.u32 %v587, 2147483648
    %v594 = vsel %vm592, %v586, %v593
    %vm595 = vcmp.eq.s32.totalorder %v590, 2
    %v596 = vxor.u32 %v586, 2147483648
    %v597 = vsel %vm595, %v596, %v587
    %v598 = vsel %vm591, %v594, %v597
    %v599 = vsel %vm588, nan, %v598
    %v600 = vmul.f32 %v599, %v494
    %v601 = vmul.f32 %v600, 5.0132565
    %v602 = vmul.f32 %v601, %v54
    %s603 = scalar_lea.vmem [#allocation7], 24
    %604 = vst [vmem:[%s603] sm:$0xff] %v602
    %v605 = vmul.f32 %v54, %v157
    %v606 = vmul.f32 %v39, 0.22254816
    %v607 = vmul.f32 %v36, 4.4934096
    %v608 = vand.u32 2147483647, %v607
    %vm609 = vcmp.le.f32.partialorder %v608, 0.7853982
    %vm610 = vcmp.lt.s32.totalorder %v607, 0
    %v611 = vand.u32 %v607, 2139095040
    %v612 = vshrl.u32 %v611, 23
    %v613 = vsub.s32 %v612, 127
    %v614 = vand.u32 2147483647, %v607
    %v615 = vand.u32 %v614, 8388607
    %v616 = vor.u32 %v615, 8388608
    %v617 = vsub.s32 0, %v616
    %v618 = vadd.s32 %v613, 1
    %vm619 = vcmp.gt.s32.totalorder %v618, 0
    %v620 = vsel %vm619, %v618, 0
    %v621 = vshrl.u32 %v620, 5
    %v622 = vand.u32 %v620, 31
    %v623 = vsub.s32 32, %v622
    %v624 = vshrl.u32 683565275, %v623
    %v625 = vshll.u32 683565275, %v622
    %v626 = vshrl.u32 2475754826, %v623
    %v627 = vor.u32 %v625, %v626
    %v628 = vshll.u32 2475754826, %v622
    %v629 = vshrl.u32 2131351028, %v623
    %v630 = vor.u32 %v628, %v629
    %v631 = vshll.u32 2131351028, %v622
    %v632 = vshrl.u32 2102212464, %v623
    %v633 = vor.u32 %v631, %v632
    %v634 = vshll.u32 2102212464, %v622
    %v635 = vshrl.u32 920167782, %v623
    %v636 = vor.u32 %v634, %v635
    %v637 = vshll.u32 920167782, %v622
    %v638 = vshrl.u32 1326507024, %v623
    %v639 = vor.u32 %v637, %v638
    %vm640 = vcmp.lt.s32.totalorder %v621, 1
    %vm641 = vcmp.lt.s32.totalorder %v621, 2
    %vm642 = vcmp.lt.s32.totalorder %v621, 3
    %vm643 = vcmp.lt.s32.totalorder %v621, 4
    %v644 = vsel %vm640, %v624, %v627
    %v645 = vsel %vm643, %v633, 2102212464
    %v646 = vsel %vm642, %v630, %v645
    %v647 = vsel %vm641, %v644, %v646
    %v648 = vsel %vm640, %v627, %v630
    %v649 = vsel %vm643, %v636, 920167782
    %v650 = vsel %vm642, %v633, %v649
    %v651 = vsel %vm641, %v648, %v650
    %v652 = vsel %vm640, %v630, %v633
    %v653 = vsel %vm643, %v639, 1326507024
    %v654 = vsel %vm642, %v636, %v653
    %v655 = vsel %vm641, %v652, %v654
    %v656 = vshll.u32 %v616, 8
    %v657 = vmul.u32.u64.compose %v656, %v655
    %v658 = vextract.low.u32 %v657
    %v659 = vextract.high.u32 %v657
    %v660 = vmul.u32.u64.compose %v656, %v651
    %v661 = vextract.low.u32 %v660
    %v662 = vextract.high.u32 %v660
    %v663 = vmul.u32 %v656, %v647
    %v664 = vadd.s32 %v659, %v661
    %vm665 = vc.u32 %v659, %v661
    %v666 = vadd.s32 %v662, 1
    %v667 = vsel %vm665, %v666, %v662
    %v668 = vadd.s32 %v663, %v667
    %v669 = vadd.s32 %v668, 536870912
    %v670 = vshrl.u32 %v669, 30
    %v671 = vshll.u32 %v670, 30
    %v672 = vsub.s32 %v668, %v671
    %vm673 = vcmp.lt.s32.totalorder %v672, 0
    %v674 = vsub.s32 0, %v672
    %v675 = vsel %vm673, %v674, %v672
    %v676 = vclz %v675
    %v677 = vsub.s32 %v676, 2
    %vm678 = vcmp.gt.s32.totalorder 0, %v677
    %v679 = vsel %vm678, 0, %v677
    %v680 = vsub.s32 32, %v679
    %v681 = vshll.u32 %v672, %v679
    %v682 = vshrl.u32 %v664, %v680
    %v683 = vor.u32 %v681, %v682
    %v684 = vsub.s32 4294967266, %v679
    %v685 = vadd.s32 %v684, 127
    %v686 = vshll.u32 %v685, 23
    %v687 = vor.u32 4788187, %v686
    %v688 = vand.u32 2147483647, %v687
    %v690 = vcvt.s32.f32 %v683
    %v691 = vmul.f32 %v690, %v688
    %v692 = vxor.u32 %v691, 2147483648
    %v693 = vsel %vm610, %v692, %v691
    %v694 = vsub.s32 4, %v670
    %v695 = vsel %vm610, %v694, %v670
    %v696 = vsel %vm609, %v607, %v693
    %v697 = vsel %vm609, 0, %v695
    %v698 = vcosq.f32.pop %v696
    %v699 = vsinq.f32.pop %v696
    %vm700 = vweird.f32 %v607
    %v701 = vadd.s32 %v697, 3
    %v702 = vand.u32 %v701, 3
    %vm703 = vcmp.lt.s32.totalorder %v702, 2
    %vm704 = vcmp.eq.s32.totalorder %v702, 0
    %v705 = vxor.u32 %v699, 2147483648
    %v706 = vsel %vm704, %v698, %v705
    %vm707 = vcmp.eq.s32.totalorder %v702, 2
    %v708 = vxor.u32 %v698, 2147483648
    %v709 = vsel %vm707, %v708, %v699
    %v710 = vsel %vm703, %v706, %v709
    %v711 = vsel %vm700, nan, %v710
    %v712 = vmul.f32 %v711, %v606
    %v713 = vand.u32 2147483647, %v607
    %vm714 = vcmp.le.f32.partialorder %v713, 0.7853982
    %vm715 = vcmp.lt.s32.totalorder %v607, 0
    %v716 = vand.u32 %v607, 2139095040
    %v717 = vshrl.u32 %v716, 23
    %v718 = vsub.s32 %v717, 127
    %v719 = vand.u32 2147483647, %v607
    %v720 = vand.u32 %v719, 8388607
    %v721 = vor.u32 %v720, 8388608
    %v722 = vsub.s32 0, %v721
    %v723 = vadd.s32 %v718, 1
    %vm724 = vcmp.gt.s32.totalorder %v723, 0
    %v725 = vsel %vm724, %v723, 0
    %v726 = vshrl.u32 %v725, 5
    %v727 = vand.u32 %v725, 31
    %v728 = vsub.s32 32, %v727
    %v729 = vshrl.u32 683565275, %v728
    %v730 = vshll.u32 683565275, %v727
    %v731 = vshrl.u32 2475754826, %v728
    %v732 = vor.u32 %v730, %v731
    %v733 = vshll.u32 2475754826, %v727
    %v734 = vshrl.u32 2131351028, %v728
    %v735 = vor.u32 %v733, %v734
    %v736 = vshll.u32 2131351028, %v727
    %v737 = vshrl.u32 2102212464, %v728
    %v738 = vor.u32 %v736, %v737
    %v739 = vshll.u32 2102212464, %v727
    %v740 = vshrl.u32 920167782, %v728
    %v741 = vor.u32 %v739, %v740
    %v742 = vshll.u32 920167782, %v727
    %v743 = vshrl.u32 1326507024, %v728
    %v744 = vor.u32 %v742, %v743
    %vm745 = vcmp.lt.s32.totalorder %v726, 1
    %vm746 = vcmp.lt.s32.totalorder %v726, 2
    %vm747 = vcmp.lt.s32.totalorder %v726, 3
    %vm748 = vcmp.lt.s32.totalorder %v726, 4
    %v749 = vsel %vm745, %v729, %v732
    %v750 = vsel %vm748, %v738, 2102212464
    %v751 = vsel %vm747, %v735, %v750
    %v752 = vsel %vm746, %v749, %v751
    %v753 = vsel %vm745, %v732, %v735
    %v754 = vsel %vm748, %v741, 920167782
    %v755 = vsel %vm747, %v738, %v754
    %v756 = vsel %vm746, %v753, %v755
    %v757 = vsel %vm745, %v735, %v738
    %v758 = vsel %vm748, %v744, 1326507024
    %v759 = vsel %vm747, %v741, %v758
    %v760 = vsel %vm746, %v757, %v759
    %v761 = vshll.u32 %v721, 8
    %v762 = vmul.u32.u64.compose %v761, %v760
    %v763 = vextract.low.u32 %v762
    %v764 = vextract.high.u32 %v762
    %v765 = vmul.u32.u64.compose %v761, %v756
    %v766 = vextract.low.u32 %v765
    %v767 = vextract.high.u32 %v765
    %v768 = vmul.u32 %v761, %v752
    %v769 = vadd.s32 %v764, %v766
    %vm770 = vc.u32 %v764, %v766
    %v771 = vadd.s32 %v767, 1
    %v772 = vsel %vm770, %v771, %v767
    %v773 = vadd.s32 %v768, %v772
    %v774 = vadd.s32 %v773, 536870912
    %v775 = vshrl.u32 %v774, 30
    %v776 = vshll.u32 %v775, 30
    %v777 = vsub.s32 %v773, %v776
    %vm778 = vcmp.lt.s32.totalorder %v777, 0
    %v779 = vsub.s32 0, %v777
    %v780 = vsel %vm778, %v779, %v777
    %v781 = vclz %v780
    %v782 = vsub.s32 %v781, 2
    %vm783 = vcmp.gt.s32.totalorder 0, %v782
    %v784 = vsel %vm783, 0, %v782
    %v785 = vsub.s32 32, %v784
    %v786 = vshll.u32 %v777, %v784
    %v787 = vshrl.u32 %v769, %v785
    %v788 = vor.u32 %v786, %v787
    %v789 = vsub.s32 4294967266, %v784
    %v790 = vadd.s32 %v789, 127
    %v791 = vshll.u32 %v790, 23
    %v792 = vor.u32 4788187, %v791
    %v793 = vand.u32 2147483647, %v792
    %v795 = vcvt.s32.f32 %v788
    %v796 = vmul.f32 %v795, %v793
    %v797 = vxor.u32 %v796, 2147483648
    %v798 = vsel %vm715, %v797, %v796
    %v799 = vsub.s32 4, %v775
    %v800 = vsel %vm715, %v799, %v775
    %v801 = vsel %vm714, %v607, %v798
    %v802 = vsel %vm714, 0, %v800
    %v803 = vcosq.f32.pop %v801
    %v804 = vsinq.f32.pop %v801
    %vm805 = vweird.f32 %v607
    %v806 = vand.u32 %v802, 3
    %vm807 = vcmp.lt.s32.totalorder %v806, 2
    %vm808 = vcmp.eq.s32.totalorder %v806, 0
    %v809 = vxor.u32 %v804, 2147483648
    %v810 = vsel %vm808, %v803, %v809
    %vm811 = vcmp.eq.s32.totalorder %v806, 2
    %v812 = vxor.u32 %v803, 2147483648
    %v813 = vsel %vm811, %v812, %v804
    %v814 = vsel %vm807, %v810, %v813
    %v815 = vsel %vm805, nan, %v814
    %v816 = vsub.f32 %v712, %v815
    %v817 = vmul.f32 %v816, %v606
    %v818 = vmul.f32 %v817, 3.1808534
    %v819 = vmul.f32 %v818, %v605
    %s820 = scalar_lea.vmem [#allocation7], 32
    %821 = vst [vmem:[%s820] sm:$0xff] %v819
    %v822 = vmul.f32 %v39, 0.12944561
    %v823 = vmul.f32 %v36, 7.7252517
    %v824 = vand.u32 2147483647, %v823
    %vm825 = vcmp.le.f32.partialorder %v824, 0.7853982
    %vm826 = vcmp.lt.s32.totalorder %v823, 0
    %v827 = vand.u32 %v823, 2139095040
    %v828 = vshrl.u32 %v827, 23
    %v829 = vsub.s32 %v828, 127
    %v830 = vand.u32 2147483647, %v823
    %v831 = vand.u32 %v830, 8388607
    %v832 = vor.u32 %v831, 8388608
    %v833 = vsub.s32 0, %v832
    %v834 = vadd.s32 %v829, 1
    %vm835 = vcmp.gt.s32.totalorder %v834, 0
    %v836 = vsel %vm835, %v834, 0
    %v837 = vshrl.u32 %v836, 5
    %v838 = vand.u32 %v836, 31
    %v839 = vsub.s32 32, %v838
    %v840 = vshrl.u32 683565275, %v839
    %v841 = vshll.u32 683565275, %v838
    %v842 = vshrl.u32 2475754826, %v839
    %v843 = vor.u32 %v841, %v842
    %v844 = vshll.u32 2475754826, %v838
    %v845 = vshrl.u32 2131351028, %v839
    %v846 = vor.u32 %v844, %v845
    %v847 = vshll.u32 2131351028, %v838
    %v848 = vshrl.u32 2102212464, %v839
    %v849 = vor.u32 %v847, %v848
    %v850 = vshll.u32 2102212464, %v838
    %v851 = vshrl.u32 920167782, %v839
    %v852 = vor.u32 %v850, %v851
    %v853 = vshll.u32 920167782, %v838
    %v854 = vshrl.u32 1326507024, %v839
    %v855 = vor.u32 %v853, %v854
    %vm856 = vcmp.lt.s32.totalorder %v837, 1
    %vm857 = vcmp.lt.s32.totalorder %v837, 2
    %vm858 = vcmp.lt.s32.totalorder %v837, 3
    %vm859 = vcmp.lt.s32.totalorder %v837, 4
    %v860 = vsel %vm856, %v840, %v843
    %v861 = vsel %vm859, %v849, 2102212464
    %v862 = vsel %vm858, %v846, %v861
    %v863 = vsel %vm857, %v860, %v862
    %v864 = vsel %vm856, %v843, %v846
    %v865 = vsel %vm859, %v852, 920167782
    %v866 = vsel %vm858, %v849, %v865
    %v867 = vsel %vm857, %v864, %v866
    %v868 = vsel %vm856, %v846, %v849
    %v869 = vsel %vm859, %v855, 1326507024
    %v870 = vsel %vm858, %v852, %v869
    %v871 = vsel %vm857, %v868, %v870
    %v872 = vshll.u32 %v832, 8
    %v873 = vmul.u32.u64.compose %v872, %v871
    %v874 = vextract.low.u32 %v873
    %v875 = vextract.high.u32 %v873
    %v876 = vmul.u32.u64.compose %v872, %v867
    %v877 = vextract.low.u32 %v876
    %v878 = vextract.high.u32 %v876
    %v879 = vmul.u32 %v872, %v863
    %v880 = vadd.s32 %v875, %v877
    %vm881 = vc.u32 %v875, %v877
    %v882 = vadd.s32 %v878, 1
    %v883 = vsel %vm881, %v882, %v878
    %v884 = vadd.s32 %v879, %v883
    %v885 = vadd.s32 %v884, 536870912
    %v886 = vshrl.u32 %v885, 30
    %v887 = vshll.u32 %v886, 30
    %v888 = vsub.s32 %v884, %v887
    %vm889 = vcmp.lt.s32.totalorder %v888, 0
    %v890 = vsub.s32 0, %v888
    %v891 = vsel %vm889, %v890, %v888
    %v892 = vclz %v891
    %v893 = vsub.s32 %v892, 2
    %vm894 = vcmp.gt.s32.totalorder 0, %v893
    %v895 = vsel %vm894, 0, %v893
    %v896 = vsub.s32 32, %v895
    %v897 = vshll.u32 %v888, %v895
    %v898 = vshrl.u32 %v880, %v896
    %v899 = vor.u32 %v897, %v898
    %v900 = vsub.s32 4294967266, %v895
    %v901 = vadd.s32 %v900, 127
    %v902 = vshll.u32 %v901, 23
    %v903 = vor.u32 4788187, %v902
    %v904 = vand.u32 2147483647, %v903
    %v906 = vcvt.s32.f32 %v899
    %v907 = vmul.f32 %v906, %v904
    %v908 = vxor.u32 %v907, 2147483648
    %v909 = vsel %vm826, %v908, %v907
    %v910 = vsub.s32 4, %v886
    %v911 = vsel %vm826, %v910, %v886
    %v912 = vsel %vm825, %v823, %v909
    %v913 = vsel %vm825, 0, %v911
    %v914 = vcosq.f32.pop %v912
    %v915 = vsinq.f32.pop %v912
    %vm916 = vweird.f32 %v823
    %v917 = vadd.s32 %v913, 3
    %v918 = vand.u32 %v917, 3
    %vm919 = vcmp.lt.s32.totalorder %v918, 2
    %vm920 = vcmp.eq.s32.totalorder %v918, 0
    %v921 = vxor.u32 %v915, 2147483648
    %v922 = vsel %vm920, %v914, %v921
    %vm923 = vcmp.eq.s32.totalorder %v918, 2
    %v924 = vxor.u32 %v914, 2147483648
    %v925 = vsel %vm923, %v924, %v915
    %v926 = vsel %vm919, %v922, %v925
    %v927 = vsel %vm916, nan, %v926
    %v928 = vmul.f32 %v927, %v822
    %v929 = vand.u32 2147483647, %v823
    %vm930 = vcmp.le.f32.partialorder %v929, 0.7853982
    %vm931 = vcmp.lt.s32.totalorder %v823, 0
    %v932 = vand.u32 %v823, 2139095040
    %v933 = vshrl.u32 %v932, 23
    %v934 = vsub.s32 %v933, 127
    %v935 = vand.u32 2147483647, %v823
    %v936 = vand.u32 %v935, 8388607
    %v937 = vor.u32 %v936, 8388608
    %v938 = vsub.s32 0, %v937
    %v939 = vadd.s32 %v934, 1
    %vm940 = vcmp.gt.s32.totalorder %v939, 0
    %v941 = vsel %vm940, %v939, 0
    %v942 = vshrl.u32 %v941, 5
    %v943 = vand.u32 %v941, 31
    %v944 = vsub.s32 32, %v943
    %v945 = vshrl.u32 683565275, %v944
    %v946 = vshll.u32 683565275, %v943
    %v947 = vshrl.u32 2475754826, %v944
    %v948 = vor.u32 %v946, %v947
    %v949 = vshll.u32 2475754826, %v943
    %v950 = vshrl.u32 2131351028, %v944
    %v951 = vor.u32 %v949, %v950
    %v952 = vshll.u32 2131351028, %v943
    %v953 = vshrl.u32 2102212464, %v944
    %v954 = vor.u32 %v952, %v953
    %v955 = vshll.u32 2102212464, %v943
    %v956 = vshrl.u32 920167782, %v944
    %v957 = vor.u32 %v955, %v956
    %v958 = vshll.u32 920167782, %v943
    %v959 = vshrl.u32 1326507024, %v944
    %v960 = vor.u32 %v958, %v959
    %vm961 = vcmp.lt.s32.totalorder %v942, 1
    %vm962 = vcmp.lt.s32.totalorder %v942, 2
    %vm963 = vcmp.lt.s32.totalorder %v942, 3
    %vm964 = vcmp.lt.s32.totalorder %v942, 4
    %v965 = vsel %vm961, %v945, %v948
    %v966 = vsel %vm964, %v954, 2102212464
    %v967 = vsel %vm963, %v951, %v966
    %v968 = vsel %vm962, %v965, %v967
    %v969 = vsel %vm961, %v948, %v951
    %v970 = vsel %vm964, %v957, 920167782
    %v971 = vsel %vm963, %v954, %v970
    %v972 = vsel %vm962, %v969, %v971
    %v973 = vsel %vm961, %v951, %v954
    %v974 = vsel %vm964, %v960, 1326507024
    %v975 = vsel %vm963, %v957, %v974
    %v976 = vsel %vm962, %v973, %v975
    %v977 = vshll.u32 %v937, 8
    %v978 = vmul.u32.u64.compose %v977, %v976
    %v979 = vextract.low.u32 %v978
    %v980 = vextract.high.u32 %v978
    %v981 = vmul.u32.u64.compose %v977, %v972
    %v982 = vextract.low.u32 %v981
    %v983 = vextract.high.u32 %v981
    %v984 = vmul.u32 %v977, %v968
    %v985 = vadd.s32 %v980, %v982
    %vm986 = vc.u32 %v980, %v982
    %v987 = vadd.s32 %v983, 1
    %v988 = vsel %vm986, %v987, %v983
    %v989 = vadd.s32 %v984, %v988
    %v990 = vadd.s32 %v989, 536870912
    %v991 = vshrl.u32 %v990, 30
    %v992 = vshll.u32 %v991, 30
    %v993 = vsub.s32 %v989, %v992
    %vm994 = vcmp.lt.s32.totalorder %v993, 0
    %v995 = vsub.s32 0, %v993
    %v996 = vsel %vm994, %v995, %v993
    %v997 = vclz %v996
    %v998 = vsub.s32 %v997, 2
    %vm999 = vcmp.gt.s32.totalorder 0, %v998
    %v1000 = vsel %vm999, 0, %v998
    %v1001 = vsub.s32 32, %v1000
    %v1002 = vshll.u32 %v993, %v1000
    %v1003 = vshrl.u32 %v985, %v1001
    %v1004 = vor.u32 %v1002, %v1003
    %v1005 = vsub.s32 4294967266, %v1000
    %v1006 = vadd.s32 %v1005, 127
    %v1007 = vshll.u32 %v1006, 23
    %v1008 = vor.u32 4788187, %v1007
    %v1009 = vand.u32 2147483647, %v1008
    %v1011 = vcvt.s32.f32 %v1004
    %v1012 = vmul.f32 %v1011, %v1009
    %v1013 = vxor.u32 %v1012, 2147483648
    %v1014 = vsel %vm931, %v1013, %v1012
    %v1015 = vsub.s32 4, %v991
    %v1016 = vsel %vm931, %v1015, %v991
    %v1017 = vsel %vm930, %v823, %v1014
    %v1018 = vsel %vm930, 0, %v1016
    %v1019 = vcosq.f32.pop %v1017
    %v1020 = vsinq.f32.pop %v1017
    %vm1021 = vweird.f32 %v823
    %v1022 = vand.u32 %v1018, 3
    %vm1023 = vcmp.lt.s32.totalorder %v1022, 2
    %vm1024 = vcmp.eq.s32.totalorder %v1022, 0
    %v1025 = vxor.u32 %v1020, 2147483648
    %v1026 = vsel %vm1024, %v1019, %v1025
    %vm1027 = vcmp.eq.s32.totalorder %v1022, 2
    %v1028 = vxor.u32 %v1019, 2147483648
    %v1029 = vsel %vm1027, %v1028, %v1020
    %v1030 = vsel %vm1023, %v1026, %v1029
    %v1031 = vsel %vm1021, nan, %v1030
    %v1032 = vsub.f32 %v928, %v1031
    %v1033 = vmul.f32 %v1032, %v822
    %v1034 = vmul.f32 %v1033, 5.3825955
    %v1035 = vmul.f32 %v1034, %v605
    %s1036 = scalar_lea.vmem [#allocation7], 40
    %1037 = vst [vmem:[%s1036] sm:$0xff] %v1035
    %v1038 = vmul.f32 %v39, 0.091708444
    %v1039 = vmul.f32 %v36, 10.904121
    %v1040 = vand.u32 2147483647, %v1039
    %vm1041 = vcmp.le.f32.partialorder %v1040, 0.7853982
    %vm1042 = vcmp.lt.s32.totalorder %v1039, 0
    %v1043 = vand.u32 %v1039, 2139095040
    %v1044 = vshrl.u32 %v1043, 23
    %v1045 = vsub.s32 %v1044, 127
    %v1046 = vand.u32 2147483647, %v1039
    %v1047 = vand.u32 %v1046, 8388607
    %v1048 = vor.u32 %v1047, 8388608
    %v1049 = vsub.s32 0, %v1048
    %v1050 = vadd.s32 %v1045, 1
    %vm1051 = vcmp.gt.s32.totalorder %v1050, 0
    %v1052 = vsel %vm1051, %v1050, 0
    %v1053 = vshrl.u32 %v1052, 5
    %v1054 = vand.u32 %v1052, 31
    %v1055 = vsub.s32 32, %v1054
    %v1056 = vshrl.u32 683565275, %v1055
    %v1057 = vshll.u32 683565275, %v1054
    %v1058 = vshrl.u32 2475754826, %v1055
    %v1059 = vor.u32 %v1057, %v1058
    %v1060 = vshll.u32 2475754826, %v1054
    %v1061 = vshrl.u32 2131351028, %v1055
    %v1062 = vor.u32 %v1060, %v1061
    %v1063 = vshll.u32 2131351028, %v1054
    %v1064 = vshrl.u32 2102212464, %v1055
    %v1065 = vor.u32 %v1063, %v1064
    %v1066 = vshll.u32 2102212464, %v1054
    %v1067 = vshrl.u32 920167782, %v1055
    %v1068 = vor.u32 %v1066, %v1067
    %v1069 = vshll.u32 920167782, %v1054
    %v1070 = vshrl.u32 1326507024, %v1055
    %v1071 = vor.u32 %v1069, %v1070
    %vm1072 = vcmp.lt.s32.totalorder %v1053, 1
    %vm1073 = vcmp.lt.s32.totalorder %v1053, 2
    %vm1074 = vcmp.lt.s32.totalorder %v1053, 3
    %vm1075 = vcmp.lt.s32.totalorder %v1053, 4
    %v1076 = vsel %vm1072, %v1056, %v1059
    %v1077 = vsel %vm1075, %v1065, 2102212464
    %v1078 = vsel %vm1074, %v1062, %v1077
    %v1079 = vsel %vm1073, %v1076, %v1078
    %v1080 = vsel %vm1072, %v1059, %v1062
    %v1081 = vsel %vm1075, %v1068, 920167782
    %v1082 = vsel %vm1074, %v1065, %v1081
    %v1083 = vsel %vm1073, %v1080, %v1082
    %v1084 = vsel %vm1072, %v1062, %v1065
    %v1085 = vsel %vm1075, %v1071, 1326507024
    %v1086 = vsel %vm1074, %v1068, %v1085
    %v1087 = vsel %vm1073, %v1084, %v1086
    %v1088 = vshll.u32 %v1048, 8
    %v1089 = vmul.u32.u64.compose %v1088, %v1087
    %v1090 = vextract.low.u32 %v1089
    %v1091 = vextract.high.u32 %v1089
    %v1092 = vmul.u32.u64.compose %v1088, %v1083
    %v1093 = vextract.low.u32 %v1092
    %v1094 = vextract.high.u32 %v1092
    %v1095 = vmul.u32 %v1088, %v1079
    %v1096 = vadd.s32 %v1091, %v1093
    %vm1097 = vc.u32 %v1091, %v1093
    %v1098 = vadd.s32 %v1094, 1
    %v1099 = vsel %vm1097, %v1098, %v1094
    %v1100 = vadd.s32 %v1095, %v1099
    %v1101 = vadd.s32 %v1100, 536870912
    %v1102 = vshrl.u32 %v1101, 30
    %v1103 = vshll.u32 %v1102, 30
    %v1104 = vsub.s32 %v1100, %v1103
    %vm1105 = vcmp.lt.s32.totalorder %v1104, 0
    %v1106 = vsub.s32 0, %v1104
    %v1107 = vsel %vm1105, %v1106, %v1104
    %v1108 = vclz %v1107
    %v1109 = vsub.s32 %v1108, 2
    %vm1110 = vcmp.gt.s32.totalorder 0, %v1109
    %v1111 = vsel %vm1110, 0, %v1109
    %v1112 = vsub.s32 32, %v1111
    %v1113 = vshll.u32 %v1104, %v1111
    %v1114 = vshrl.u32 %v1096, %v1112
    %v1115 = vor.u32 %v1113, %v1114
    %v1116 = vsub.s32 4294967266, %v1111
    %v1117 = vadd.s32 %v1116, 127
    %v1118 = vshll.u32 %v1117, 23
    %v1119 = vor.u32 4788187, %v1118
    %v1120 = vand.u32 2147483647, %v1119
    %v1122 = vcvt.s32.f32 %v1115
    %v1123 = vmul.f32 %v1122, %v1120
    %v1124 = vxor.u32 %v1123, 2147483648
    %v1125 = vsel %vm1042, %v1124, %v1123
    %v1126 = vsub.s32 4, %v1102
    %v1127 = vsel %vm1042, %v1126, %v1102
    %v1128 = vsel %vm1041, %v1039, %v1125
    %v1129 = vsel %vm1041, 0, %v1127
    %v1130 = vcosq.f32.pop %v1128
    %v1131 = vsinq.f32.pop %v1128
    %vm1132 = vweird.f32 %v1039
    %v1133 = vadd.s32 %v1129, 3
    %v1134 = vand.u32 %v1133, 3
    %vm1135 = vcmp.lt.s32.totalorder %v1134, 2
    %vm1136 = vcmp.eq.s32.totalorder %v1134, 0
    %v1137 = vxor.u32 %v1131, 2147483648
    %v1138 = vsel %vm1136, %v1130, %v1137
    %vm1139 = vcmp.eq.s32.totalorder %v1134, 2
    %v1140 = vxor.u32 %v1130, 2147483648
    %v1141 = vsel %vm1139, %v1140, %v1131
    %v1142 = vsel %vm1135, %v1138, %v1141
    %v1143 = vsel %vm1132, nan, %v1142
    %v1144 = vmul.f32 %v1143, %v1038
    %v1145 = vand.u32 2147483647, %v1039
    %vm1146 = vcmp.le.f32.partialorder %v1145, 0.7853982
    %vm1147 = vcmp.lt.s32.totalorder %v1039, 0
    %v1148 = vand.u32 %v1039, 2139095040
    %v1149 = vshrl.u32 %v1148, 23
    %v1150 = vsub.s32 %v1149, 127
    %v1151 = vand.u32 2147483647, %v1039
    %v1152 = vand.u32 %v1151, 8388607
    %v1153 = vor.u32 %v1152, 8388608
    %v1154 = vsub.s32 0, %v1153
    %v1155 = vadd.s32 %v1150, 1
    %vm1156 = vcmp.gt.s32.totalorder %v1155, 0
    %v1157 = vsel %vm1156, %v1155, 0
    %v1158 = vshrl.u32 %v1157, 5
    %v1159 = vand.u32 %v1157, 31
    %v1160 = vsub.s32 32, %v1159
    %v1161 = vshrl.u32 683565275, %v1160
    %v1162 = vshll.u32 683565275, %v1159
    %v1163 = vshrl.u32 2475754826, %v1160
    %v1164 = vor.u32 %v1162, %v1163
    %v1165 = vshll.u32 2475754826, %v1159
    %v1166 = vshrl.u32 2131351028, %v1160
    %v1167 = vor.u32 %v1165, %v1166
    %v1168 = vshll.u32 2131351028, %v1159
    %v1169 = vshrl.u32 2102212464, %v1160
    %v1170 = vor.u32 %v1168, %v1169
    %v1171 = vshll.u32 2102212464, %v1159
    %v1172 = vshrl.u32 920167782, %v1160
    %v1173 = vor.u32 %v1171, %v1172
    %v1174 = vshll.u32 920167782, %v1159
    %v1175 = vshrl.u32 1326507024, %v1160
    %v1176 = vor.u32 %v1174, %v1175
    %vm1177 = vcmp.lt.s32.totalorder %v1158, 1
    %vm1178 = vcmp.lt.s32.totalorder %v1158, 2
    %vm1179 = vcmp.lt.s32.totalorder %v1158, 3
    %vm1180 = vcmp.lt.s32.totalorder %v1158, 4
    %v1181 = vsel %vm1177, %v1161, %v1164
    %v1182 = vsel %vm1180, %v1170, 2102212464
    %v1183 = vsel %vm1179, %v1167, %v1182
    %v1184 = vsel %vm1178, %v1181, %v1183
    %v1185 = vsel %vm1177, %v1164, %v1167
    %v1186 = vsel %vm1180, %v1173, 920167782
    %v1187 = vsel %vm1179, %v1170, %v1186
    %v1188 = vsel %vm1178, %v1185, %v1187
    %v1189 = vsel %vm1177, %v1167, %v1170
    %v1190 = vsel %vm1180, %v1176, 1326507024
    %v1191 = vsel %vm1179, %v1173, %v1190
    %v1192 = vsel %vm1178, %v1189, %v1191
    %v1193 = vshll.u32 %v1153, 8
    %v1194 = vmul.u32.u64.compose %v1193, %v1192
    %v1195 = vextract.low.u32 %v1194
    %v1196 = vextract.high.u32 %v1194
    %v1197 = vmul.u32.u64.compose %v1193, %v1188
    %v1198 = vextract.low.u32 %v1197
    %v1199 = vextract.high.u32 %v1197
    %v1200 = vmul.u32 %v1193, %v1184
    %v1201 = vadd.s32 %v1196, %v1198
    %vm1202 = vc.u32 %v1196, %v1198
    %v1203 = vadd.s32 %v1199, 1
    %v1204 = vsel %vm1202, %v1203, %v1199
    %v1205 = vadd.s32 %v1200, %v1204
    %v1206 = vadd.s32 %v1205, 536870912
    %v1207 = vshrl.u32 %v1206, 30
    %v1208 = vshll.u32 %v1207, 30
    %v1209 = vsub.s32 %v1205, %v1208
    %vm1210 = vcmp.lt.s32.totalorder %v1209, 0
    %v1211 = vsub.s32 0, %v1209
    %v1212 = vsel %vm1210, %v1211, %v1209
    %v1213 = vclz %v1212
    %v1214 = vsub.s32 %v1213, 2
    %vm1215 = vcmp.gt.s32.totalorder 0, %v1214
    %v1216 = vsel %vm1215, 0, %v1214
    %v1217 = vsub.s32 32, %v1216
    %v1218 = vshll.u32 %v1209, %v1216
    %v1219 = vshrl.u32 %v1201, %v1217
    %v1220 = vor.u32 %v1218, %v1219
    %v1221 = vsub.s32 4294967266, %v1216
    %v1222 = vadd.s32 %v1221, 127
    %v1223 = vshll.u32 %v1222, 23
    %v1224 = vor.u32 4788187, %v1223
    %v1225 = vand.u32 2147483647, %v1224
    %v1227 = vcvt.s32.f32 %v1220
    %v1228 = vmul.f32 %v1227, %v1225
    %v1229 = vxor.u32 %v1228, 2147483648
    %v1230 = vsel %vm1147, %v1229, %v1228
    %v1231 = vsub.s32 4, %v1207
    %v1232 = vsel %vm1147, %v1231, %v1207
    %v1233 = vsel %vm1146, %v1039, %v1230
    %v1234 = vsel %vm1146, 0, %v1232
    %v1235 = vcosq.f32.pop %v1233
    %v1236 = vsinq.f32.pop %v1233
    %vm1237 = vweird.f32 %v1039
    %v1238 = vand.u32 %v1234, 3
    %vm1239 = vcmp.lt.s32.totalorder %v1238, 2
    %vm1240 = vcmp.eq.s32.totalorder %v1238, 0
    %v1241 = vxor.u32 %v1236, 2147483648
    %v1242 = vsel %vm1240, %v1235, %v1241
    %vm1243 = vcmp.eq.s32.totalorder %v1238, 2
    %v1244 = vxor.u32 %v1235, 2147483648
    %v1245 = vsel %vm1243, %v1244, %v1236
    %v1246 = vsel %vm1239, %v1242, %v1245
    %v1247 = vsel %vm1237, nan, %v1246
    %v1248 = vsub.f32 %v1144, %v1247
    %v1249 = vmul.f32 %v1248, %v1038
    %v1250 = vmul.f32 %v1249, 7.566239
    %v1251 = vmul.f32 %v1250, %v605
    %s1252 = scalar_lea.vmem [#allocation7], 48
    %1253 = vst [vmem:[%s1252] sm:$0xff] %v1251
    %v1254 = vmul.f32 %v39, 0.071092434
    %v1255 = vmul.f32 %v36, 14.066194
    %v1256 = vand.u32 2147483647, %v1255
    %vm1257 = vcmp.le.f32.partialorder %v1256, 0.7853982
    %vm1258 = vcmp.lt.s32.totalorder %v1255, 0
    %v1259 = vand.u32 %v1255, 2139095040
    %v1260 = vshrl.u32 %v1259, 23
    %v1261 = vsub.s32 %v1260, 127
    %v1262 = vand.u32 2147483647, %v1255
    %v1263 = vand.u32 %v1262, 8388607
    %v1264 = vor.u32 %v1263, 8388608
    %v1265 = vsub.s32 0, %v1264
    %v1266 = vadd.s32 %v1261, 1
    %vm1267 = vcmp.gt.s32.totalorder %v1266, 0
    %v1268 = vsel %vm1267, %v1266, 0
    %v1269 = vshrl.u32 %v1268, 5
    %v1270 = vand.u32 %v1268, 31
    %v1271 = vsub.s32 32, %v1270
    %v1272 = vshrl.u32 683565275, %v1271
    %v1273 = vshll.u32 683565275, %v1270
    %v1274 = vshrl.u32 2475754826, %v1271
    %v1275 = vor.u32 %v1273, %v1274
    %v1276 = vshll.u32 2475754826, %v1270
    %v1277 = vshrl.u32 2131351028, %v1271
    %v1278 = vor.u32 %v1276, %v1277
    %v1279 = vshll.u32 2131351028, %v1270
    %v1280 = vshrl.u32 2102212464, %v1271
    %v1281 = vor.u32 %v1279, %v1280
    %v1282 = vshll.u32 2102212464, %v1270
    %v1283 = vshrl.u32 920167782, %v1271
    %v1284 = vor.u32 %v1282, %v1283
    %v1285 = vshll.u32 920167782, %v1270
    %v1286 = vshrl.u32 1326507024, %v1271
    %v1287 = vor.u32 %v1285, %v1286
    %vm1288 = vcmp.lt.s32.totalorder %v1269, 1
    %vm1289 = vcmp.lt.s32.totalorder %v1269, 2
    %vm1290 = vcmp.lt.s32.totalorder %v1269, 3
    %vm1291 = vcmp.lt.s32.totalorder %v1269, 4
    %v1292 = vsel %vm1288, %v1272, %v1275
    %v1293 = vsel %vm1291, %v1281, 2102212464
    %v1294 = vsel %vm1290, %v1278, %v1293
    %v1295 = vsel %vm1289, %v1292, %v1294
    %v1296 = vsel %vm1288, %v1275, %v1278
    %v1297 = vsel %vm1291, %v1284, 920167782
    %v1298 = vsel %vm1290, %v1281, %v1297
    %v1299 = vsel %vm1289, %v1296, %v1298
    %v1300 = vsel %vm1288, %v1278, %v1281
    %v1301 = vsel %vm1291, %v1287, 1326507024
    %v1302 = vsel %vm1290, %v1284, %v1301
    %v1303 = vsel %vm1289, %v1300, %v1302
    %v1304 = vshll.u32 %v1264, 8
    %v1305 = vmul.u32.u64.compose %v1304, %v1303
    %v1306 = vextract.low.u32 %v1305
    %v1307 = vextract.high.u32 %v1305
    %v1308 = vmul.u32.u64.compose %v1304, %v1299
    %v1309 = vextract.low.u32 %v1308
    %v1310 = vextract.high.u32 %v1308
    %v1311 = vmul.u32 %v1304, %v1295
    %v1312 = vadd.s32 %v1307, %v1309
    %vm1313 = vc.u32 %v1307, %v1309
    %v1314 = vadd.s32 %v1310, 1
    %v1315 = vsel %vm1313, %v1314, %v1310
    %v1316 = vadd.s32 %v1311, %v1315
    %v1317 = vadd.s32 %v1316, 536870912
    %v1318 = vshrl.u32 %v1317, 30
    %v1319 = vshll.u32 %v1318, 30
    %v1320 = vsub.s32 %v1316, %v1319
    %vm1321 = vcmp.lt.s32.totalorder %v1320, 0
    %v1322 = vsub.s32 0, %v1320
    %v1323 = vsel %vm1321, %v1322, %v1320
    %v1324 = vclz %v1323
    %v1325 = vsub.s32 %v1324, 2
    %vm1326 = vcmp.gt.s32.totalorder 0, %v1325
    %v1327 = vsel %vm1326, 0, %v1325
    %v1328 = vsub.s32 32, %v1327
    %v1329 = vshll.u32 %v1320, %v1327
    %v1330 = vshrl.u32 %v1312, %v1328
    %v1331 = vor.u32 %v1329, %v1330
    %v1332 = vsub.s32 4294967266, %v1327
    %v1333 = vadd.s32 %v1332, 127
    %v1334 = vshll.u32 %v1333, 23
    %v1335 = vor.u32 4788187, %v1334
    %v1336 = vand.u32 2147483647, %v1335
    %v1338 = vcvt.s32.f32 %v1331
    %v1339 = vmul.f32 %v1338, %v1336
    %v1340 = vxor.u32 %v1339, 2147483648
    %v1341 = vsel %vm1258, %v1340, %v1339
    %v1342 = vsub.s32 4, %v1318
    %v1343 = vsel %vm1258, %v1342, %v1318
    %v1344 = vsel %vm1257, %v1255, %v1341
    %v1345 = vsel %vm1257, 0, %v1343
    %v1346 = vcosq.f32.pop %v1344
    %v1347 = vsinq.f32.pop %v1344
    %vm1348 = vweird.f32 %v1255
    %v1349 = vadd.s32 %v1345, 3
    %v1350 = vand.u32 %v1349, 3
    %vm1351 = vcmp.lt.s32.totalorder %v1350, 2
    %vm1352 = vcmp.eq.s32.totalorder %v1350, 0
    %v1353 = vxor.u32 %v1347, 2147483648
    %v1354 = vsel %vm1352, %v1346, %v1353
    %vm1355 = vcmp.eq.s32.totalorder %v1350, 2
    %v1356 = vxor.u32 %v1346, 2147483648
    %v1357 = vsel %vm1355, %v1356, %v1347
    %v1358 = vsel %vm1351, %v1354, %v1357
    %v1359 = vsel %vm1348, nan, %v1358
    %v1360 = vmul.f32 %v1359, %v1254
    %v1361 = vand.u32 2147483647, %v1255
    %vm1362 = vcmp.le.f32.partialorder %v1361, 0.7853982
    %vm1363 = vcmp.lt.s32.totalorder %v1255, 0
    %v1364 = vand.u32 %v1255, 2139095040
    %v1365 = vshrl.u32 %v1364, 23
    %v1366 = vsub.s32 %v1365, 127
    %v1367 = vand.u32 2147483647, %v1255
    %v1368 = vand.u32 %v1367, 8388607
    %v1369 = vor.u32 %v1368, 8388608
    %v1370 = vsub.s32 0, %v1369
    %v1371 = vadd.s32 %v1366, 1
    %vm1372 = vcmp.gt.s32.totalorder %v1371, 0
    %v1373 = vsel %vm1372, %v1371, 0
    %v1374 = vshrl.u32 %v1373, 5
    %v1375 = vand.u32 %v1373, 31
    %v1376 = vsub.s32 32, %v1375
    %v1377 = vshrl.u32 683565275, %v1376
    %v1378 = vshll.u32 683565275, %v1375
    %v1379 = vshrl.u32 2475754826, %v1376
    %v1380 = vor.u32 %v1378, %v1379
    %v1381 = vshll.u32 2475754826, %v1375
    %v1382 = vshrl.u32 2131351028, %v1376
    %v1383 = vor.u32 %v1381, %v1382
    %v1384 = vshll.u32 2131351028, %v1375
    %v1385 = vshrl.u32 2102212464, %v1376
    %v1386 = vor.u32 %v1384, %v1385
    %v1387 = vshll.u32 2102212464, %v1375
    %v1388 = vshrl.u32 920167782, %v1376
    %v1389 = vor.u32 %v1387, %v1388
    %v1390 = vshll.u32 920167782, %v1375
    %v1391 = vshrl.u32 1326507024, %v1376
    %v1392 = vor.u32 %v1390, %v1391
    %vm1393 = vcmp.lt.s32.totalorder %v1374, 1
    %vm1394 = vcmp.lt.s32.totalorder %v1374, 2
    %vm1395 = vcmp.lt.s32.totalorder %v1374, 3
    %vm1396 = vcmp.lt.s32.totalorder %v1374, 4
    %v1397 = vsel %vm1393, %v1377, %v1380
    %v1398 = vsel %vm1396, %v1386, 2102212464
    %v1399 = vsel %vm1395, %v1383, %v1398
    %v1400 = vsel %vm1394, %v1397, %v1399
    %v1401 = vsel %vm1393, %v1380, %v1383
    %v1402 = vsel %vm1396, %v1389, 920167782
    %v1403 = vsel %vm1395, %v1386, %v1402
    %v1404 = vsel %vm1394, %v1401, %v1403
    %v1405 = vsel %vm1393, %v1383, %v1386
    %v1406 = vsel %vm1396, %v1392, 1326507024
    %v1407 = vsel %vm1395, %v1389, %v1406
    %v1408 = vsel %vm1394, %v1405, %v1407
    %v1409 = vshll.u32 %v1369, 8
    %v1410 = vmul.u32.u64.compose %v1409, %v1408
    %v1411 = vextract.low.u32 %v1410
    %v1412 = vextract.high.u32 %v1410
    %v1413 = vmul.u32.u64.compose %v1409, %v1404
    %v1414 = vextract.low.u32 %v1413
    %v1415 = vextract.high.u32 %v1413
    %v1416 = vmul.u32 %v1409, %v1400
    %v1417 = vadd.s32 %v1412, %v1414
    %vm1418 = vc.u32 %v1412, %v1414
    %v1419 = vadd.s32 %v1415, 1
    %v1420 = vsel %vm1418, %v1419, %v1415
    %v1421 = vadd.s32 %v1416, %v1420
    %v1422 = vadd.s32 %v1421, 536870912
    %v1423 = vshrl.u32 %v1422, 30
    %v1424 = vshll.u32 %v1423, 30
    %v1425 = vsub.s32 %v1421, %v1424
    %vm1426 = vcmp.lt.s32.totalorder %v1425, 0
    %v1427 = vsub.s32 0, %v1425
    %v1428 = vsel %vm1426, %v1427, %v1425
    %v1429 = vclz %v1428
    %v1430 = vsub.s32 %v1429, 2
    %vm1431 = vcmp.gt.s32.totalorder 0, %v1430
    %v1432 = vsel %vm1431, 0, %v1430
    %v1433 = vsub.s32 32, %v1432
    %v1434 = vshll.u32 %v1425, %v1432
    %v1435 = vshrl.u32 %v1417, %v1433
    %v1436 = vor.u32 %v1434, %v1435
    %v1437 = vsub.s32 4294967266, %v1432
    %v1438 = vadd.s32 %v1437, 127
    %v1439 = vshll.u32 %v1438, 23
    %v1440 = vor.u32 4788187, %v1439
    %v1441 = vand.u32 2147483647, %v1440
    %v1443 = vcvt.s32.f32 %v1436
    %v1444 = vmul.f32 %v1443, %v1441
    %v1445 = vxor.u32 %v1444, 2147483648
    %v1446 = vsel %vm1363, %v1445, %v1444
    %v1447 = vsub.s32 4, %v1423
    %v1448 = vsel %vm1363, %v1447, %v1423
    %v1449 = vsel %vm1362, %v1255, %v1446
    %v1450 = vsel %vm1362, 0, %v1448
    %v1451 = vcosq.f32.pop %v1449
    %v1452 = vsinq.f32.pop %v1449
    %vm1453 = vweird.f32 %v1255
    %v1454 = vand.u32 %v1450, 3
    %vm1455 = vcmp.lt.s32.totalorder %v1454, 2
    %vm1456 = vcmp.eq.s32.totalorder %v1454, 0
    %v1457 = vxor.u32 %v1452, 2147483648
    %v1458 = vsel %vm1456, %v1451, %v1457
    %vm1459 = vcmp.eq.s32.totalorder %v1454, 2
    %v1460 = vxor.u32 %v1451, 2147483648
    %v1461 = vsel %vm1459, %v1460, %v1452
    %v1462 = vsel %vm1455, %v1458, %v1461
    %v1463 = vsel %vm1453, nan, %v1462
    %v1464 = vsub.f32 %v1360, %v1463
    %v1465 = vmul.f32 %v1464, %v1254
    %v1466 = vmul.f32 %v1465, 9.744106
    %v1467 = vmul.f32 %v1466, %v605
    %s1468 = scalar_lea.vmem [#allocation7], 56
    %1469 = vst [vmem:[%s1468] sm:$0xff] %v1467
    %v1470 = vmul.f32 %v54, %v161
    %v1471 = vmul.f32 %v39, 0.17350692
    %v1472 = vmul.f32 %v36, 5.763459
    %v1473 = vand.u32 2147483647, %v1472
    %vm1474 = vcmp.le.f32.partialorder %v1473, 0.7853982
    %vm1475 = vcmp.lt.s32.totalorder %v1472, 0
    %v1476 = vand.u32 %v1472, 2139095040
    %v1477 = vshrl.u32 %v1476, 23
    %v1478 = vsub.s32 %v1477, 127
    %v1479 = vand.u32 2147483647, %v1472
    %v1480 = vand.u32 %v1479, 8388607
    %v1481 = vor.u32 %v1480, 8388608
    %v1482 = vsub.s32 0, %v1481
    %v1483 = vadd.s32 %v1478, 1
    %vm1484 = vcmp.gt.s32.totalorder %v1483, 0
    %v1485 = vsel %vm1484, %v1483, 0
    %v1486 = vshrl.u32 %v1485, 5
    %v1487 = vand.u32 %v1485, 31
    %v1488 = vsub.s32 32, %v1487
    %v1489 = vshrl.u32 683565275, %v1488
    %v1490 = vshll.u32 683565275, %v1487
    %v1491 = vshrl.u32 2475754826, %v1488
    %v1492 = vor.u32 %v1490, %v1491
    %v1493 = vshll.u32 2475754826, %v1487
    %v1494 = vshrl.u32 2131351028, %v1488
    %v1495 = vor.u32 %v1493, %v1494
    %v1496 = vshll.u32 2131351028, %v1487
    %v1497 = vshrl.u32 2102212464, %v1488
    %v1498 = vor.u32 %v1496, %v1497
    %v1499 = vshll.u32 2102212464, %v1487
    %v1500 = vshrl.u32 920167782, %v1488
    %v1501 = vor.u32 %v1499, %v1500
    %v1502 = vshll.u32 920167782, %v1487
    %v1503 = vshrl.u32 1326507024, %v1488
    %v1504 = vor.u32 %v1502, %v1503
    %vm1505 = vcmp.lt.s32.totalorder %v1486, 1
    %vm1506 = vcmp.lt.s32.totalorder %v1486, 2
    %vm1507 = vcmp.lt.s32.totalorder %v1486, 3
    %vm1508 = vcmp.lt.s32.totalorder %v1486, 4
    %v1509 = vsel %vm1505, %v1489, %v1492
    %v1510 = vsel %vm1508, %v1498, 2102212464
    %v1511 = vsel %vm1507, %v1495, %v1510
    %v1512 = vsel %vm1506, %v1509, %v1511
    %v1513 = vsel %vm1505, %v1492, %v1495
    %v1514 = vsel %vm1508, %v1501, 920167782
    %v1515 = vsel %vm1507, %v1498, %v1514
    %v1516 = vsel %vm1506, %v1513, %v1515
    %v1517 = vsel %vm1505, %v1495, %v1498
    %v1518 = vsel %vm1508, %v1504, 1326507024
    %v1519 = vsel %vm1507, %v1501, %v1518
    %v1520 = vsel %vm1506, %v1517, %v1519
    %v1521 = vshll.u32 %v1481, 8
    %v1522 = vmul.u32.u64.compose %v1521, %v1520
    %v1523 = vextract.low.u32 %v1522
    %v1524 = vextract.high.u32 %v1522
    %v1525 = vmul.u32.u64.compose %v1521, %v1516
    %v1526 = vextract.low.u32 %v1525
    %v1527 = vextract.high.u32 %v1525
    %v1528 = vmul.u32 %v1521, %v1512
    %v1529 = vadd.s32 %v1524, %v1526
    %vm1530 = vc.u32 %v1524, %v1526
    %v1531 = vadd.s32 %v1527, 1
    %v1532 = vsel %vm1530, %v1531, %v1527
    %v1533 = vadd.s32 %v1528, %v1532
    %v1534 = vadd.s32 %v1533, 536870912
    %v1535 = vshrl.u32 %v1534, 30
    %v1536 = vshll.u32 %v1535, 30
    %v1537 = vsub.s32 %v1533, %v1536
    %vm1538 = vcmp.lt.s32.totalorder %v1537, 0
    %v1539 = vsub.s32 0, %v1537
    %v1540 = vsel %vm1538, %v1539, %v1537
    %v1541 = vclz %v1540
    %v1542 = vsub.s32 %v1541, 2
    %vm1543 = vcmp.gt.s32.totalorder 0, %v1542
    %v1544 = vsel %vm1543, 0, %v1542
    %v1545 = vsub.s32 32, %v1544
    %v1546 = vshll.u32 %v1537, %v1544
    %v1547 = vshrl.u32 %v1529, %v1545
    %v1548 = vor.u32 %v1546, %v1547
    %v1549 = vsub.s32 4294967266, %v1544
    %v1550 = vadd.s32 %v1549, 127
    %v1551 = vshll.u32 %v1550, 23
    %v1552 = vor.u32 4788187, %v1551
    %v1553 = vand.u32 2147483647, %v1552
    %v1555 = vcvt.s32.f32 %v1548
    %v1556 = vmul.f32 %v1555, %v1553
    %v1557 = vxor.u32 %v1556, 2147483648
    %v1558 = vsel %vm1475, %v1557, %v1556
    %v1559 = vsub.s32 4, %v1535
    %v1560 = vsel %vm1475, %v1559, %v1535
    %v1561 = vsel %vm1474, %v1472, %v1558
    %v1562 = vsel %vm1474, 0, %v1560
    %v1563 = vcosq.f32.pop %v1561
    %v1564 = vsinq.f32.pop %v1561
    %vm1565 = vweird.f32 %v1472
    %v1566 = vadd.s32 %v1562, 3
    %v1567 = vand.u32 %v1566, 3
    %vm1568 = vcmp.lt.s32.totalorder %v1567, 2
    %vm1569 = vcmp.eq.s32.totalorder %v1567, 0
    %v1570 = vxor.u32 %v1564, 2147483648
    %v1571 = vsel %vm1569, %v1563, %v1570
    %vm1572 = vcmp.eq.s32.totalorder %v1567, 2
    %v1573 = vxor.u32 %v1563, 2147483648
    %v1574 = vsel %vm1572, %v1573, %v1564
    %v1575 = vsel %vm1568, %v1571, %v1574
    %v1576 = vsel %vm1565, nan, %v1575
    %v1577 = vmul.f32 %v1576, %v1471
    %v1578 = vand.u32 2147483647, %v1472
    %vm1579 = vcmp.le.f32.partialorder %v1578, 0.7853982
    %vm1580 = vcmp.lt.s32.totalorder %v1472, 0
    %v1581 = vand.u32 %v1472, 2139095040
    %v1582 = vshrl.u32 %v1581, 23
    %v1583 = vsub.s32 %v1582, 127
    %v1584 = vand.u32 2147483647, %v1472
    %v1585 = vand.u32 %v1584, 8388607
    %v1586 = vor.u32 %v1585, 8388608
    %v1587 = vsub.s32 0, %v1586
    %v1588 = vadd.s32 %v1583, 1
    %vm1589 = vcmp.gt.s32.totalorder %v1588, 0
    %v1590 = vsel %vm1589, %v1588, 0
    %v1591 = vshrl.u32 %v1590, 5
    %v1592 = vand.u32 %v1590, 31
    %v1593 = vsub.s32 32, %v1592
    %v1594 = vshrl.u32 683565275, %v1593
    %v1595 = vshll.u32 683565275, %v1592
    %v1596 = vshrl.u32 2475754826, %v1593
    %v1597 = vor.u32 %v1595, %v1596
    %v1598 = vshll.u32 2475754826, %v1592
    %v1599 = vshrl.u32 2131351028, %v1593
    %v1600 = vor.u32 %v1598, %v1599
    %v1601 = vshll.u32 2131351028, %v1592
    %v1602 = vshrl.u32 2102212464, %v1593
    %v1603 = vor.u32 %v1601, %v1602
    %v1604 = vshll.u32 2102212464, %v1592
    %v1605 = vshrl.u32 920167782, %v1593
    %v1606 = vor.u32 %v1604, %v1605
    %v1607 = vshll.u32 920167782, %v1592
    %v1608 = vshrl.u32 1326507024, %v1593
    %v1609 = vor.u32 %v1607, %v1608
    %vm1610 = vcmp.lt.s32.totalorder %v1591, 1
    %vm1611 = vcmp.lt.s32.totalorder %v1591, 2
    %vm1612 = vcmp.lt.s32.totalorder %v1591, 3
    %vm1613 = vcmp.lt.s32.totalorder %v1591, 4
    %v1614 = vsel %vm1610, %v1594, %v1597
    %v1615 = vsel %vm1613, %v1603, 2102212464
    %v1616 = vsel %vm1612, %v1600, %v1615
    %v1617 = vsel %vm1611, %v1614, %v1616
    %v1618 = vsel %vm1610, %v1597, %v1600
    %v1619 = vsel %vm1613, %v1606, 920167782
    %v1620 = vsel %vm1612, %v1603, %v1619
    %v1621 = vsel %vm1611, %v1618, %v1620
    %v1622 = vsel %vm1610, %v1600, %v1603
    %v1623 = vsel %vm1613, %v1609, 1326507024
    %v1624 = vsel %vm1612, %v1606, %v1623
    %v1625 = vsel %vm1611, %v1622, %v1624
    %v1626 = vshll.u32 %v1586, 8
    %v1627 = vmul.u32.u64.compose %v1626, %v1625
    %v1628 = vextract.low.u32 %v1627
    %v1629 = vextract.high.u32 %v1627
    %v1630 = vmul.u32.u64.compose %v1626, %v1621
    %v1631 = vextract.low.u32 %v1630
    %v1632 = vextract.high.u32 %v1630
    %v1633 = vmul.u32 %v1626, %v1617
    %v1634 = vadd.s32 %v1629, %v1631
    %vm1635 = vc.u32 %v1629, %v1631
    %v1636 = vadd.s32 %v1632, 1
    %v1637 = vsel %vm1635, %v1636, %v1632
    %v1638 = vadd.s32 %v1633, %v1637
    %v1639 = vadd.s32 %v1638, 536870912
    %v1640 = vshrl.u32 %v1639, 30
    %v1641 = vshll.u32 %v1640, 30
    %v1642 = vsub.s32 %v1638, %v1641
    %vm1643 = vcmp.lt.s32.totalorder %v1642, 0
    %v1644 = vsub.s32 0, %v1642
    %v1645 = vsel %vm1643, %v1644, %v1642
    %v1646 = vclz %v1645
    %v1647 = vsub.s32 %v1646, 2
    %vm1648 = vcmp.gt.s32.totalorder 0, %v1647
    %v1649 = vsel %vm1648, 0, %v1647
    %v1650 = vsub.s32 32, %v1649
    %v1651 = vshll.u32 %v1642, %v1649
    %v1652 = vshrl.u32 %v1634, %v1650
    %v1653 = vor.u32 %v1651, %v1652
    %v1654 = vsub.s32 4294967266, %v1649
    %v1655 = vadd.s32 %v1654, 127
    %v1656 = vshll.u32 %v1655, 23
    %v1657 = vor.u32 4788187, %v1656
    %v1658 = vand.u32 2147483647, %v1657
    %v1660 = vcvt.s32.f32 %v1653
    %v1661 = vmul.f32 %v1660, %v1658
    %v1662 = vxor.u32 %v1661, 2147483648
    %v1663 = vsel %vm1580, %v1662, %v1661
    %v1664 = vsub.s32 4, %v1640
    %v1665 = vsel %vm1580, %v1664, %v1640
    %v1666 = vsel %vm1579, %v1472, %v1663
    %v1667 = vsel %vm1579, 0, %v1665
    %v1668 = vcosq.f32.pop %v1666
    %v1669 = vsinq.f32.pop %v1666
    %vm1670 = vweird.f32 %v1472
    %v1671 = vand.u32 %v1667, 3
    %vm1672 = vcmp.lt.s32.totalorder %v1671, 2
    %vm1673 = vcmp.eq.s32.totalorder %v1671, 0
    %v1674 = vxor.u32 %v1669, 2147483648
    %v1675 = vsel %vm1673, %v1668, %v1674
    %vm1676 = vcmp.eq.s32.totalorder %v1671, 2
    %v1677 = vxor.u32 %v1668, 2147483648
    %v1678 = vsel %vm1676, %v1677, %v1669
    %v1679 = vsel %vm1672, %v1675, %v1678
    %v1680 = vsel %vm1670, nan, %v1679
    %v1681 = vsub.f32 %v1577, %v1680
    %v1682 = vmul.f32 %v1681, %v1471
    %v1683 = vmul.f32 %v1471, 3.0
    %v1684 = vmul.f32 %v1683, %v1682
    %v1685 = vsub.f32 %v1684, %v1577
    %v1686 = vmul.f32 %v1685, 5.3885574
    %v1687 = vmul.f32 %v1686, %v1470
    %s1688 = scalar_lea.vmem [#allocation7], 64
    %1689 = vst [vmem:[%s1688] sm:$0xff] %v1687
    %v1690 = vmul.f32 %v39, 0.109950386
    %v1691 = vmul.f32 %v36, 9.095012
    %v1692 = vand.u32 2147483647, %v1691
    %vm1693 = vcmp.le.f32.partialorder %v1692, 0.7853982
    %vm1694 = vcmp.lt.s32.totalorder %v1691, 0
    %v1695 = vand.u32 %v1691, 2139095040
    %v1696 = vshrl.u32 %v1695, 23
    %v1697 = vsub.s32 %v1696, 127
    %v1698 = vand.u32 2147483647, %v1691
    %v1699 = vand.u32 %v1698, 8388607
    %v1700 = vor.u32 %v1699, 8388608
    %v1701 = vsub.s32 0, %v1700
    %v1702 = vadd.s32 %v1697, 1
    %vm1703 = vcmp.gt.s32.totalorder %v1702, 0
    %v1704 = vsel %vm1703, %v1702, 0
    %v1705 = vshrl.u32 %v1704, 5
    %v1706 = vand.u32 %v1704, 31
    %v1707 = vsub.s32 32, %v1706
    %v1708 = vshrl.u32 683565275, %v1707
    %v1709 = vshll.u32 683565275, %v1706
    %v1710 = vshrl.u32 2475754826, %v1707
    %v1711 = vor.u32 %v1709, %v1710
    %v1712 = vshll.u32 2475754826, %v1706
    %v1713 = vshrl.u32 2131351028, %v1707
    %v1714 = vor.u32 %v1712, %v1713
    %v1715 = vshll.u32 2131351028, %v1706
    %v1716 = vshrl.u32 2102212464, %v1707
    %v1717 = vor.u32 %v1715, %v1716
    %v1718 = vshll.u32 2102212464, %v1706
    %v1719 = vshrl.u32 920167782, %v1707
    %v1720 = vor.u32 %v1718, %v1719
    %v1721 = vshll.u32 920167782, %v1706
    %v1722 = vshrl.u32 1326507024, %v1707
    %v1723 = vor.u32 %v1721, %v1722
    %vm1724 = vcmp.lt.s32.totalorder %v1705, 1
    %vm1725 = vcmp.lt.s32.totalorder %v1705, 2
    %vm1726 = vcmp.lt.s32.totalorder %v1705, 3
    %vm1727 = vcmp.lt.s32.totalorder %v1705, 4
    %v1728 = vsel %vm1724, %v1708, %v1711
    %v1729 = vsel %vm1727, %v1717, 2102212464
    %v1730 = vsel %vm1726, %v1714, %v1729
    %v1731 = vsel %vm1725, %v1728, %v1730
    %v1732 = vsel %vm1724, %v1711, %v1714
    %v1733 = vsel %vm1727, %v1720, 920167782
    %v1734 = vsel %vm1726, %v1717, %v1733
    %v1735 = vsel %vm1725, %v1732, %v1734
    %v1736 = vsel %vm1724, %v1714, %v1717
    %v1737 = vsel %vm1727, %v1723, 1326507024
    %v1738 = vsel %vm1726, %v1720, %v1737
    %v1739 = vsel %vm1725, %v1736, %v1738
    %v1740 = vshll.u32 %v1700, 8
    %v1741 = vmul.u32.u64.compose %v1740, %v1739
    %v1742 = vextract.low.u32 %v1741
    %v1743 = vextract.high.u32 %v1741
    %v1744 = vmul.u32.u64.compose %v1740, %v1735
    %v1745 = vextract.low.u32 %v1744
    %v1746 = vextract.high.u32 %v1744
    %v1747 = vmul.u32 %v1740, %v1731
    %v1748 = vadd.s32 %v1743, %v1745
    %vm1749 = vc.u32 %v1743, %v1745
    %v1750 = vadd.s32 %v1746, 1
    %v1751 = vsel %vm1749, %v1750, %v1746
    %v1752 = vadd.s32 %v1747, %v1751
    %v1753 = vadd.s32 %v1752, 536870912
    %v1754 = vshrl.u32 %v1753, 30
    %v1755 = vshll.u32 %v1754, 30
    %v1756 = vsub.s32 %v1752, %v1755
    %vm1757 = vcmp.lt.s32.totalorder %v1756, 0
    %v1758 = vsub.s32 0, %v1756
    %v1759 = vsel %vm1757, %v1758, %v1756
    %v1760 = vclz %v1759
    %v1761 = vsub.s32 %v1760, 2
    %vm1762 = vcmp.gt.s32.totalorder 0, %v1761
    %v1763 = vsel %vm1762, 0, %v1761
    %v1764 = vsub.s32 32, %v1763
    %v1765 = vshll.u32 %v1756, %v1763
    %v1766 = vshrl.u32 %v1748, %v1764
    %v1767 = vor.u32 %v1765, %v1766
    %v1768 = vsub.s32 4294967266, %v1763
    %v1769 = vadd.s32 %v1768, 127
    %v1770 = vshll.u32 %v1769, 23
    %v1771 = vor.u32 4788187, %v1770
    %v1772 = vand.u32 2147483647, %v1771
    %v1774 = vcvt.s32.f32 %v1767
    %v1775 = vmul.f32 %v1774, %v1772
    %v1776 = vxor.u32 %v1775, 2147483648
    %v1777 = vsel %vm1694, %v1776, %v1775
    %v1778 = vsub.s32 4, %v1754
    %v1779 = vsel %vm1694, %v1778, %v1754
    %v1780 = vsel %vm1693, %v1691, %v1777
    %v1781 = vsel %vm1693, 0, %v1779
    %v1782 = vcosq.f32.pop %v1780
    %v1783 = vsinq.f32.pop %v1780
    %vm1784 = vweird.f32 %v1691
    %v1785 = vadd.s32 %v1781, 3
    %v1786 = vand.u32 %v1785, 3
    %vm1787 = vcmp.lt.s32.totalorder %v1786, 2
    %vm1788 = vcmp.eq.s32.totalorder %v1786, 0
    %v1789 = vxor.u32 %v1783, 2147483648
    %v1790 = vsel %vm1788, %v1782, %v1789
    %vm1791 = vcmp.eq.s32.totalorder %v1786, 2
    %v1792 = vxor.u32 %v1782, 2147483648
    %v1793 = vsel %vm1791, %v1792, %v1783
    %v1794 = vsel %vm1787, %v1790, %v1793
    %v1795 = vsel %vm1784, nan, %v1794
    %v1796 = vmul.f32 %v1795, %v1690
    %v1797 = vand.u32 2147483647, %v1691
    %vm1798 = vcmp.le.f32.partialorder %v1797, 0.7853982
    %vm1799 = vcmp.lt.s32.totalorder %v1691, 0
    %v1800 = vand.u32 %v1691, 2139095040
    %v1801 = vshrl.u32 %v1800, 23
    %v1802 = vsub.s32 %v1801, 127
    %v1803 = vand.u32 2147483647, %v1691
    %v1804 = vand.u32 %v1803, 8388607
    %v1805 = vor.u32 %v1804, 8388608
    %v1806 = vsub.s32 0, %v1805
    %v1807 = vadd.s32 %v1802, 1
    %vm1808 = vcmp.gt.s32.totalorder %v1807, 0
    %v1809 = vsel %vm1808, %v1807, 0
    %v1810 = vshrl.u32 %v1809, 5
    %v1811 = vand.u32 %v1809, 31
    %v1812 = vsub.s32 32, %v1811
    %v1813 = vshrl.u32 683565275, %v1812
    %v1814 = vshll.u32 683565275, %v1811
    %v1815 = vshrl.u32 2475754826, %v1812
    %v1816 = vor.u32 %v1814, %v1815
    %v1817 = vshll.u32 2475754826, %v1811
    %v1818 = vshrl.u32 2131351028, %v1812
    %v1819 = vor.u32 %v1817, %v1818
    %v1820 = vshll.u32 2131351028, %v1811
    %v1821 = vshrl.u32 2102212464, %v1812
    %v1822 = vor.u32 %v1820, %v1821
    %v1823 = vshll.u32 2102212464, %v1811
    %v1824 = vshrl.u32 920167782, %v1812
    %v1825 = vor.u32 %v1823, %v1824
    %v1826 = vshll.u32 920167782, %v1811
    %v1827 = vshrl.u32 1326507024, %v1812
    %v1828 = vor.u32 %v1826, %v1827
    %vm1829 = vcmp.lt.s32.totalorder %v1810, 1
    %vm1830 = vcmp.lt.s32.totalorder %v1810, 2
    %vm1831 = vcmp.lt.s32.totalorder %v1810, 3
    %vm1832 = vcmp.lt.s32.totalorder %v1810, 4
    %v1833 = vsel %vm1829, %v1813, %v1816
    %v1834 = vsel %vm1832, %v1822, 2102212464
    %v1835 = vsel %vm1831, %v1819, %v1834
    %v1836 = vsel %vm1830, %v1833, %v1835
    %v1837 = vsel %vm1829, %v1816, %v1819
    %v1838 = vsel %vm1832, %v1825, 920167782
    %v1839 = vsel %vm1831, %v1822, %v1838
    %v1840 = vsel %vm1830, %v1837, %v1839
    %v1841 = vsel %vm1829, %v1819, %v1822
    %v1842 = vsel %vm1832, %v1828, 1326507024
    %v1843 = vsel %vm1831, %v1825, %v1842
    %v1844 = vsel %vm1830, %v1841, %v1843
    %v1845 = vshll.u32 %v1805, 8
    %v1846 = vmul.u32.u64.compose %v1845, %v1844
    %v1847 = vextract.low.u32 %v1846
    %v1848 = vextract.high.u32 %v1846
    %v1849 = vmul.u32.u64.compose %v1845, %v1840
    %v1850 = vextract.low.u32 %v1849
    %v1851 = vextract.high.u32 %v1849
    %v1852 = vmul.u32 %v1845, %v1836
    %v1853 = vadd.s32 %v1848, %v1850
    %vm1854 = vc.u32 %v1848, %v1850
    %v1855 = vadd.s32 %v1851, 1
    %v1856 = vsel %vm1854, %v1855, %v1851
    %v1857 = vadd.s32 %v1852, %v1856
    %v1858 = vadd.s32 %v1857, 536870912
    %v1859 = vshrl.u32 %v1858, 30
    %v1860 = vshll.u32 %v1859, 30
    %v1861 = vsub.s32 %v1857, %v1860
    %vm1862 = vcmp.lt.s32.totalorder %v1861, 0
    %v1863 = vsub.s32 0, %v1861
    %v1864 = vsel %vm1862, %v1863, %v1861
    %v1865 = vclz %v1864
    %v1866 = vsub.s32 %v1865, 2
    %vm1867 = vcmp.gt.s32.totalorder 0, %v1866
    %v1868 = vsel %vm1867, 0, %v1866
    %v1869 = vsub.s32 32, %v1868
    %v1870 = vshll.u32 %v1861, %v1868
    %v1871 = vshrl.u32 %v1853, %v1869
    %v1872 = vor.u32 %v1870, %v1871
    %v1873 = vsub.s32 4294967266, %v1868
    %v1874 = vadd.s32 %v1873, 127
    %v1875 = vshll.u32 %v1874, 23
    %v1876 = vor.u32 4788187, %v1875
    %v1877 = vand.u32 2147483647, %v1876
    %v1879 = vcvt.s32.f32 %v1872
    %v1880 = vmul.f32 %v1879, %v1877
    %v1881 = vxor.u32 %v1880, 2147483648
    %v1882 = vsel %vm1799, %v1881, %v1880
    %v1883 = vsub.s32 4, %v1859
    %v1884 = vsel %vm1799, %v1883, %v1859
    %v1885 = vsel %vm1798, %v1691, %v1882
    %v1886 = vsel %vm1798, 0, %v1884
    %v1887 = vcosq.f32.pop %v1885
    %v1888 = vsinq.f32.pop %v1885
    %vm1889 = vweird.f32 %v1691
    %v1890 = vand.u32 %v1886, 3
    %vm1891 = vcmp.lt.s32.totalorder %v1890, 2
    %vm1892 = vcmp.eq.s32.totalorder %v1890, 0
    %v1893 = vxor.u32 %v1888, 2147483648
    %v1894 = vsel %vm1892, %v1887, %v1893
    %vm1895 = vcmp.eq.s32.totalorder %v1890, 2
    %v1896 = vxor.u32 %v1887, 2147483648
    %v1897 = vsel %vm1895, %v1896, %v1888
    %v1898 = vsel %vm1891, %v1894, %v1897
    %v1899 = vsel %vm1889, nan, %v1898
    %v1900 = vsub.f32 %v1796, %v1899
    %v1901 = vmul.f32 %v1900, %v1690
    %v1902 = vmul.f32 %v1690, 3.0
    %v1903 = vmul.f32 %v1902, %v1901
    %v1904 = vsub.f32 %v1903, %v1796
    %v1905 = vmul.f32 %v1904, 8.264368
    %v1906 = vmul.f32 %v1905, %v1470
    %s1907 = scalar_lea.vmem [#allocation7], 72
    %1908 = vst [vmem:[%s1907] sm:$0xff] %v1906
    %v1909 = vmul.f32 %v39, 0.08114946
    %v1910 = vmul.f32 %v36, 12.322941
    %v1911 = vand.u32 2147483647, %v1910
    %vm1912 = vcmp.le.f32.partialorder %v1911, 0.7853982
    %vm1913 = vcmp.lt.s32.totalorder %v1910, 0
    %v1914 = vand.u32 %v1910, 2139095040
    %v1915 = vshrl.u32 %v1914, 23
    %v1916 = vsub.s32 %v1915, 127
    %v1917 = vand.u32 2147483647, %v1910
    %v1918 = vand.u32 %v1917, 8388607
    %v1919 = vor.u32 %v1918, 8388608
    %v1920 = vsub.s32 0, %v1919
    %v1921 = vadd.s32 %v1916, 1
    %vm1922 = vcmp.gt.s32.totalorder %v1921, 0
    %v1923 = vsel %vm1922, %v1921, 0
    %v1924 = vshrl.u32 %v1923, 5
    %v1925 = vand.u32 %v1923, 31
    %v1926 = vsub.s32 32, %v1925
    %v1927 = vshrl.u32 683565275, %v1926
    %v1928 = vshll.u32 683565275, %v1925
    %v1929 = vshrl.u32 2475754826, %v1926
    %v1930 = vor.u32 %v1928, %v1929
    %v1931 = vshll.u32 2475754826, %v1925
    %v1932 = vshrl.u32 2131351028, %v1926
    %v1933 = vor.u32 %v1931, %v1932
    %v1934 = vshll.u32 2131351028, %v1925
    %v1935 = vshrl.u32 2102212464, %v1926
    %v1936 = vor.u32 %v1934, %v1935
    %v1937 = vshll.u32 2102212464, %v1925
    %v1938 = vshrl.u32 920167782, %v1926
    %v1939 = vor.u32 %v1937, %v1938
    %v1940 = vshll.u32 920167782, %v1925
    %v1941 = vshrl.u32 1326507024, %v1926
    %v1942 = vor.u32 %v1940, %v1941
    %vm1943 = vcmp.lt.s32.totalorder %v1924, 1
    %vm1944 = vcmp.lt.s32.totalorder %v1924, 2
    %vm1945 = vcmp.lt.s32.totalorder %v1924, 3
    %vm1946 = vcmp.lt.s32.totalorder %v1924, 4
    %v1947 = vsel %vm1943, %v1927, %v1930
    %v1948 = vsel %vm1946, %v1936, 2102212464
    %v1949 = vsel %vm1945, %v1933, %v1948
    %v1950 = vsel %vm1944, %v1947, %v1949
    %v1951 = vsel %vm1943, %v1930, %v1933
    %v1952 = vsel %vm1946, %v1939, 920167782
    %v1953 = vsel %vm1945, %v1936, %v1952
    %v1954 = vsel %vm1944, %v1951, %v1953
    %v1955 = vsel %vm1943, %v1933, %v1936
    %v1956 = vsel %vm1946, %v1942, 1326507024
    %v1957 = vsel %vm1945, %v1939, %v1956
    %v1958 = vsel %vm1944, %v1955, %v1957
    %v1959 = vshll.u32 %v1919, 8
    %v1960 = vmul.u32.u64.compose %v1959, %v1958
    %v1961 = vextract.low.u32 %v1960
    %v1962 = vextract.high.u32 %v1960
    %v1963 = vmul.u32.u64.compose %v1959, %v1954
    %v1964 = vextract.low.u32 %v1963
    %v1965 = vextract.high.u32 %v1963
    %v1966 = vmul.u32 %v1959, %v1950
    %v1967 = vadd.s32 %v1962, %v1964
    %vm1968 = vc.u32 %v1962, %v1964
    %v1969 = vadd.s32 %v1965, 1
    %v1970 = vsel %vm1968, %v1969, %v1965
    %v1971 = vadd.s32 %v1966, %v1970
    %v1972 = vadd.s32 %v1971, 536870912
    %v1973 = vshrl.u32 %v1972, 30
    %v1974 = vshll.u32 %v1973, 30
    %v1975 = vsub.s32 %v1971, %v1974
    %vm1976 = vcmp.lt.s32.totalorder %v1975, 0
    %v1977 = vsub.s32 0, %v1975
    %v1978 = vsel %vm1976, %v1977, %v1975
    %v1979 = vclz %v1978
    %v1980 = vsub.s32 %v1979, 2
    %vm1981 = vcmp.gt.s32.totalorder 0, %v1980
    %v1982 = vsel %vm1981, 0, %v1980
    %v1983 = vsub.s32 32, %v1982
    %v1984 = vshll.u32 %v1975, %v1982
    %v1985 = vshrl.u32 %v1967, %v1983
    %v1986 = vor.u32 %v1984, %v1985
    %v1987 = vsub.s32 4294967266, %v1982
    %v1988 = vadd.s32 %v1987, 127
    %v1989 = vshll.u32 %v1988, 23
    %v1990 = vor.u32 4788187, %v1989
    %v1991 = vand.u32 2147483647, %v1990
    %v1993 = vcvt.s32.f32 %v1986
    %v1994 = vmul.f32 %v1993, %v1991
    %v1995 = vxor.u32 %v1994, 2147483648
    %v1996 = vsel %vm1913, %v1995, %v1994
    %v1997 = vsub.s32 4, %v1973
    %v1998 = vsel %vm1913, %v1997, %v1973
    %v1999 = vsel %vm1912, %v1910, %v1996
    %v2000 = vsel %vm1912, 0, %v1998
    %v2001 = vcosq.f32.pop %v1999
    %v2002 = vsinq.f32.pop %v1999
    %vm2003 = vweird.f32 %v1910
    %v2004 = vadd.s32 %v2000, 3
    %v2005 = vand.u32 %v2004, 3
    %vm2006 = vcmp.lt.s32.totalorder %v2005, 2
    %vm2007 = vcmp.eq.s32.totalorder %v2005, 0
    %v2008 = vxor.u32 %v2002, 2147483648
    %v2009 = vsel %vm2007, %v2001, %v2008
    %vm2010 = vcmp.eq.s32.totalorder %v2005, 2
    %v2011 = vxor.u32 %v2001, 2147483648
    %v2012 = vsel %vm2010, %v2011, %v2002
    %v2013 = vsel %vm2006, %v2009, %v2012
    %v2014 = vsel %vm2003, nan, %v2013
    %v2015 = vmul.f32 %v2014, %v1909
    %v2016 = vand.u32 2147483647, %v1910
    %vm2017 = vcmp.le.f32.partialorder %v2016, 0.7853982
    %vm2018 = vcmp.lt.s32.totalorder %v1910, 0
    %v2019 = vand.u32 %v1910, 2139095040
    %v2020 = vshrl.u32 %v2019, 23
    %v2021 = vsub.s32 %v2020, 127
    %v2022 = vand.u32 2147483647, %v1910
    %v2023 = vand.u32 %v2022, 8388607
    %v2024 = vor.u32 %v2023, 8388608
    %v2025 = vsub.s32 0, %v2024
    %v2026 = vadd.s32 %v2021, 1
    %vm2027 = vcmp.gt.s32.totalorder %v2026, 0
    %v2028 = vsel %vm2027, %v2026, 0
    %v2029 = vshrl.u32 %v2028, 5
    %v2030 = vand.u32 %v2028, 31
    %v2031 = vsub.s32 32, %v2030
    %v2032 = vshrl.u32 683565275, %v2031
    %v2033 = vshll.u32 683565275, %v2030
    %v2034 = vshrl.u32 2475754826, %v2031
    %v2035 = vor.u32 %v2033, %v2034
    %v2036 = vshll.u32 2475754826, %v2030
    %v2037 = vshrl.u32 2131351028, %v2031
    %v2038 = vor.u32 %v2036, %v2037
    %v2039 = vshll.u32 2131351028, %v2030
    %v2040 = vshrl.u32 2102212464, %v2031
    %v2041 = vor.u32 %v2039, %v2040
    %v2042 = vshll.u32 2102212464, %v2030
    %v2043 = vshrl.u32 920167782, %v2031
    %v2044 = vor.u32 %v2042, %v2043
    %v2045 = vshll.u32 920167782, %v2030
    %v2046 = vshrl.u32 1326507024, %v2031
    %v2047 = vor.u32 %v2045, %v2046
    %vm2048 = vcmp.lt.s32.totalorder %v2029, 1
    %vm2049 = vcmp.lt.s32.totalorder %v2029, 2
    %vm2050 = vcmp.lt.s32.totalorder %v2029, 3
    %vm2051 = vcmp.lt.s32.totalorder %v2029, 4
    %v2052 = vsel %vm2048, %v2032, %v2035
    %v2053 = vsel %vm2051, %v2041, 2102212464
    %v2054 = vsel %vm2050, %v2038, %v2053
    %v2055 = vsel %vm2049, %v2052, %v2054
    %v2056 = vsel %vm2048, %v2035, %v2038
    %v2057 = vsel %vm2051, %v2044, 920167782
    %v2058 = vsel %vm2050, %v2041, %v2057
    %v2059 = vsel %vm2049, %v2056, %v2058
    %v2060 = vsel %vm2048, %v2038, %v2041
    %v2061 = vsel %vm2051, %v2047, 1326507024
    %v2062 = vsel %vm2050, %v2044, %v2061
    %v2063 = vsel %vm2049, %v2060, %v2062
    %v2064 = vshll.u32 %v2024, 8
    %v2065 = vmul.u32.u64.compose %v2064, %v2063
    %v2066 = vextract.low.u32 %v2065
    %v2067 = vextract.high.u32 %v2065
    %v2068 = vmul.u32.u64.compose %v2064, %v2059
    %v2069 = vextract.low.u32 %v2068
    %v2070 = vextract.high.u32 %v2068
    %v2071 = vmul.u32 %v2064, %v2055
    %v2072 = vadd.s32 %v2067, %v2069
    %vm2073 = vc.u32 %v2067, %v2069
    %v2074 = vadd.s32 %v2070, 1
    %v2075 = vsel %vm2073, %v2074, %v2070
    %v2076 = vadd.s32 %v2071, %v2075
    %v2077 = vadd.s32 %v2076, 536870912
    %v2078 = vshrl.u32 %v2077, 30
    %v2079 = vshll.u32 %v2078, 30
    %v2080 = vsub.s32 %v2076, %v2079
    %vm2081 = vcmp.lt.s32.totalorder %v2080, 0
    %v2082 = vsub.s32 0, %v2080
    %v2083 = vsel %vm2081, %v2082, %v2080
    %v2084 = vclz %v2083
    %v2085 = vsub.s32 %v2084, 2
    %vm2086 = vcmp.gt.s32.totalorder 0, %v2085
    %v2087 = vsel %vm2086, 0, %v2085
    %v2088 = vsub.s32 32, %v2087
    %v2089 = vshll.u32 %v2080, %v2087
    %v2090 = vshrl.u32 %v2072, %v2088
    %v2091 = vor.u32 %v2089, %v2090
    %v2092 = vsub.s32 4294967266, %v2087
    %v2093 = vadd.s32 %v2092, 127
    %v2094 = vshll.u32 %v2093, 23
    %v2095 = vor.u32 4788187, %v2094
    %v2096 = vand.u32 2147483647, %v2095
    %v2098 = vcvt.s32.f32 %v2091
    %v2099 = vmul.f32 %v2098, %v2096
    %v2100 = vxor.u32 %v2099, 2147483648
    %v2101 = vsel %vm2018, %v2100, %v2099
    %v2102 = vsub.s32 4, %v2078
    %v2103 = vsel %vm2018, %v2102, %v2078
    %v2104 = vsel %vm2017, %v1910, %v2101
    %v2105 = vsel %vm2017, 0, %v2103
    %v2106 = vcosq.f32.pop %v2104
    %v2107 = vsinq.f32.pop %v2104
    %vm2108 = vweird.f32 %v1910
    %v2109 = vand.u32 %v2105, 3
    %vm2110 = vcmp.lt.s32.totalorder %v2109, 2
    %vm2111 = vcmp.eq.s32.totalorder %v2109, 0
    %v2112 = vxor.u32 %v2107, 2147483648
    %v2113 = vsel %vm2111, %v2106, %v2112
    %vm2114 = vcmp.eq.s32.totalorder %v2109, 2
    %v2115 = vxor.u32 %v2106, 2147483648
    %v2116 = vsel %vm2114, %v2115, %v2107
    %v2117 = vsel %vm2110, %v2113, %v2116
    %v2118 = vsel %vm2108, nan, %v2117
    %v2119 = vsub.f32 %v2015, %v2118
    %v2120 = vmul.f32 %v2119, %v1909
    %v2121 = vmul.f32 %v1909, 3.0
    %v2122 = vmul.f32 %v2121, %v2120
    %v2123 = vsub.f32 %v2122, %v2015
    %v2124 = vmul.f32 %v2123, 11.103006
    %v2125 = vmul.f32 %v2124, %v1470
    %s2126 = scalar_lea.vmem [#allocation7], 80
    %2127 = vst [vmem:[%s2126] sm:$0xff] %v2125
    %v2128 = vmul.f32 %v39, 0.064455405
    %v2129 = vmul.f32 %v36, 15.514603
    %v2130 = vand.u32 2147483647, %v2129
    %vm2131 = vcmp.le.f32.partialorder %v2130, 0.7853982
    %vm2132 = vcmp.lt.s32.totalorder %v2129, 0
    %v2133 = vand.u32 %v2129, 2139095040
    %v2134 = vshrl.u32 %v2133, 23
    %v2135 = vsub.s32 %v2134, 127
    %v2136 = vand.u32 2147483647, %v2129
    %v2137 = vand.u32 %v2136, 8388607
    %v2138 = vor.u32 %v2137, 8388608
    %v2139 = vsub.s32 0, %v2138
    %v2140 = vadd.s32 %v2135, 1
    %vm2141 = vcmp.gt.s32.totalorder %v2140, 0
    %v2142 = vsel %vm2141, %v2140, 0
    %v2143 = vshrl.u32 %v2142, 5
    %v2144 = vand.u32 %v2142, 31
    %v2145 = vsub.s32 32, %v2144
    %v2146 = vshrl.u32 683565275, %v2145
    %v2147 = vshll.u32 683565275, %v2144
    %v2148 = vshrl.u32 2475754826, %v2145
    %v2149 = vor.u32 %v2147, %v2148
    %v2150 = vshll.u32 2475754826, %v2144
    %v2151 = vshrl.u32 2131351028, %v2145
    %v2152 = vor.u32 %v2150, %v2151
    %v2153 = vshll.u32 2131351028, %v2144
    %v2154 = vshrl.u32 2102212464, %v2145
    %v2155 = vor.u32 %v2153, %v2154
    %v2156 = vshll.u32 2102212464, %v2144
    %v2157 = vshrl.u32 920167782, %v2145
    %v2158 = vor.u32 %v2156, %v2157
    %v2159 = vshll.u32 920167782, %v2144
    %v2160 = vshrl.u32 1326507024, %v2145
    %v2161 = vor.u32 %v2159, %v2160
    %vm2162 = vcmp.lt.s32.totalorder %v2143, 1
    %vm2163 = vcmp.lt.s32.totalorder %v2143, 2
    %vm2164 = vcmp.lt.s32.totalorder %v2143, 3
    %vm2165 = vcmp.lt.s32.totalorder %v2143, 4
    %v2166 = vsel %vm2162, %v2146, %v2149
    %v2167 = vsel %vm2165, %v2155, 2102212464
    %v2168 = vsel %vm2164, %v2152, %v2167
    %v2169 = vsel %vm2163, %v2166, %v2168
    %v2170 = vsel %vm2162, %v2149, %v2152
    %v2171 = vsel %vm2165, %v2158, 920167782
    %v2172 = vsel %vm2164, %v2155, %v2171
    %v2173 = vsel %vm2163, %v2170, %v2172
    %v2174 = vsel %vm2162, %v2152, %v2155
    %v2175 = vsel %vm2165, %v2161, 1326507024
    %v2176 = vsel %vm2164, %v2158, %v2175
    %v2177 = vsel %vm2163, %v2174, %v2176
    %v2178 = vshll.u32 %v2138, 8
    %v2179 = vmul.u32.u64.compose %v2178, %v2177
    %v2180 = vextract.low.u32 %v2179
    %v2181 = vextract.high.u32 %v2179
    %v2182 = vmul.u32.u64.compose %v2178, %v2173
    %v2183 = vextract.low.u32 %v2182
    %v2184 = vextract.high.u32 %v2182
    %v2185 = vmul.u32 %v2178, %v2169
    %v2186 = vadd.s32 %v2181, %v2183
    %vm2187 = vc.u32 %v2181, %v2183
    %v2188 = vadd.s32 %v2184, 1
    %v2189 = vsel %vm2187, %v2188, %v2184
    %v2190 = vadd.s32 %v2185, %v2189
    %v2191 = vadd.s32 %v2190, 536870912
    %v2192 = vshrl.u32 %v2191, 30
    %v2193 = vshll.u32 %v2192, 30
    %v2194 = vsub.s32 %v2190, %v2193
    %vm2195 = vcmp.lt.s32.totalorder %v2194, 0
    %v2196 = vsub.s32 0, %v2194
    %v2197 = vsel %vm2195, %v2196, %v2194
    %v2198 = vclz %v2197
    %v2199 = vsub.s32 %v2198, 2
    %vm2200 = vcmp.gt.s32.totalorder 0, %v2199
    %v2201 = vsel %vm2200, 0, %v2199
    %v2202 = vsub.s32 32, %v2201
    %v2203 = vshll.u32 %v2194, %v2201
    %v2204 = vshrl.u32 %v2186, %v2202
    %v2205 = vor.u32 %v2203, %v2204
    %v2206 = vsub.s32 4294967266, %v2201
    %v2207 = vadd.s32 %v2206, 127
    %v2208 = vshll.u32 %v2207, 23
    %v2209 = vor.u32 4788187, %v2208
    %v2210 = vand.u32 2147483647, %v2209
    %v2212 = vcvt.s32.f32 %v2205
    %v2213 = vmul.f32 %v2212, %v2210
    %v2214 = vxor.u32 %v2213, 2147483648
    %v2215 = vsel %vm2132, %v2214, %v2213
    %v2216 = vsub.s32 4, %v2192
    %v2217 = vsel %vm2132, %v2216, %v2192
    %v2218 = vsel %vm2131, %v2129, %v2215
    %v2219 = vsel %vm2131, 0, %v2217
    %v2220 = vcosq.f32.pop %v2218
    %v2221 = vsinq.f32.pop %v2218
    %vm2222 = vweird.f32 %v2129
    %v2223 = vadd.s32 %v2219, 3
    %v2224 = vand.u32 %v2223, 3
    %vm2225 = vcmp.lt.s32.totalorder %v2224, 2
    %vm2226 = vcmp.eq.s32.totalorder %v2224, 0
    %v2227 = vxor.u32 %v2221, 2147483648
    %v2228 = vsel %vm2226, %v2220, %v2227
    %vm2229 = vcmp.eq.s32.totalorder %v2224, 2
    %v2230 = vxor.u32 %v2220, 2147483648
    %v2231 = vsel %vm2229, %v2230, %v2221
    %v2232 = vsel %vm2225, %v2228, %v2231
    %v2233 = vsel %vm2222, nan, %v2232
    %v2234 = vmul.f32 %v2233, %v2128
    %v2235 = vand.u32 2147483647, %v2129
    %vm2236 = vcmp.le.f32.partialorder %v2235, 0.7853982
    %vm2237 = vcmp.lt.s32.totalorder %v2129, 0
    %v2238 = vand.u32 %v2129, 2139095040
    %v2239 = vshrl.u32 %v2238, 23
    %v2240 = vsub.s32 %v2239, 127
    %v2241 = vand.u32 2147483647, %v2129
    %v2242 = vand.u32 %v2241, 8388607
    %v2243 = vor.u32 %v2242, 8388608
    %v2244 = vsub.s32 0, %v2243
    %v2245 = vadd.s32 %v2240, 1
    %vm2246 = vcmp.gt.s32.totalorder %v2245, 0
    %v2247 = vsel %vm2246, %v2245, 0
    %v2248 = vshrl.u32 %v2247, 5
    %v2249 = vand.u32 %v2247, 31
    %v2250 = vsub.s32 32, %v2249
    %v2251 = vshrl.u32 683565275, %v2250
    %v2252 = vshll.u32 683565275, %v2249
    %v2253 = vshrl.u32 2475754826, %v2250
    %v2254 = vor.u32 %v2252, %v2253
    %v2255 = vshll.u32 2475754826, %v2249
    %v2256 = vshrl.u32 2131351028, %v2250
    %v2257 = vor.u32 %v2255, %v2256
    %v2258 = vshll.u32 2131351028, %v2249
    %v2259 = vshrl.u32 2102212464, %v2250
    %v2260 = vor.u32 %v2258, %v2259
    %v2261 = vshll.u32 2102212464, %v2249
    %v2262 = vshrl.u32 920167782, %v2250
    %v2263 = vor.u32 %v2261, %v2262
    %v2264 = vshll.u32 920167782, %v2249
    %v2265 = vshrl.u32 1326507024, %v2250
    %v2266 = vor.u32 %v2264, %v2265
    %vm2267 = vcmp.lt.s32.totalorder %v2248, 1
    %vm2268 = vcmp.lt.s32.totalorder %v2248, 2
    %vm2269 = vcmp.lt.s32.totalorder %v2248, 3
    %vm2270 = vcmp.lt.s32.totalorder %v2248, 4
    %v2271 = vsel %vm2267, %v2251, %v2254
    %v2272 = vsel %vm2270, %v2260, 2102212464
    %v2273 = vsel %vm2269, %v2257, %v2272
    %v2274 = vsel %vm2268, %v2271, %v2273
    %v2275 = vsel %vm2267, %v2254, %v2257
    %v2276 = vsel %vm2270, %v2263, 920167782
    %v2277 = vsel %vm2269, %v2260, %v2276
    %v2278 = vsel %vm2268, %v2275, %v2277
    %v2279 = vsel %vm2267, %v2257, %v2260
    %v2280 = vsel %vm2270, %v2266, 1326507024
    %v2281 = vsel %vm2269, %v2263, %v2280
    %v2282 = vsel %vm2268, %v2279, %v2281
    %v2283 = vshll.u32 %v2243, 8
    %v2284 = vmul.u32.u64.compose %v2283, %v2282
    %v2285 = vextract.low.u32 %v2284
    %v2286 = vextract.high.u32 %v2284
    %v2287 = vmul.u32.u64.compose %v2283, %v2278
    %v2288 = vextract.low.u32 %v2287
    %v2289 = vextract.high.u32 %v2287
    %v2290 = vmul.u32 %v2283, %v2274
    %v2291 = vadd.s32 %v2286, %v2288
    %vm2292 = vc.u32 %v2286, %v2288
    %v2293 = vadd.s32 %v2289, 1
    %v2294 = vsel %vm2292, %v2293, %v2289
    %v2295 = vadd.s32 %v2290, %v2294
    %v2296 = vadd.s32 %v2295, 536870912
    %v2297 = vshrl.u32 %v2296, 30
    %v2298 = vshll.u32 %v2297, 30
    %v2299 = vsub.s32 %v2295, %v2298
    %vm2300 = vcmp.lt.s32.totalorder %v2299, 0
    %v2301 = vsub.s32 0, %v2299
    %v2302 = vsel %vm2300, %v2301, %v2299
    %v2303 = vclz %v2302
    %v2304 = vsub.s32 %v2303, 2
    %vm2305 = vcmp.gt.s32.totalorder 0, %v2304
    %v2306 = vsel %vm2305, 0, %v2304
    %v2307 = vsub.s32 32, %v2306
    %v2308 = vshll.u32 %v2299, %v2306
    %v2309 = vshrl.u32 %v2291, %v2307
    %v2310 = vor.u32 %v2308, %v2309
    %v2311 = vsub.s32 4294967266, %v2306
    %v2312 = vadd.s32 %v2311, 127
    %v2313 = vshll.u32 %v2312, 23
    %v2314 = vor.u32 4788187, %v2313
    %v2315 = vand.u32 2147483647, %v2314
    %v2317 = vcvt.s32.f32 %v2310
    %v2318 = vmul.f32 %v2317, %v2315
    %v2319 = vxor.u32 %v2318, 2147483648
    %v2320 = vsel %vm2237, %v2319, %v2318
    %v2321 = vsub.s32 4, %v2297
    %v2322 = vsel %vm2237, %v2321, %v2297
    %v2323 = vsel %vm2236, %v2129, %v2320
    %v2324 = vsel %vm2236, 0, %v2322
    %v2325 = vcosq.f32.pop %v2323
    %v2326 = vsinq.f32.pop %v2323
    %vm2327 = vweird.f32 %v2129
    %v2328 = vand.u32 %v2324, 3
    %vm2329 = vcmp.lt.s32.totalorder %v2328, 2
    %vm2330 = vcmp.eq.s32.totalorder %v2328, 0
    %v2331 = vxor.u32 %v2326, 2147483648
    %v2332 = vsel %vm2330, %v2325, %v2331
    %vm2333 = vcmp.eq.s32.totalorder %v2328, 2
    %v2334 = vxor.u32 %v2325, 2147483648
    %v2335 = vsel %vm2333, %v2334, %v2326
    %v2336 = vsel %vm2329, %v2332, %v2335
    %v2337 = vsel %vm2327, nan, %v2336
    %v2338 = vsub.f32 %v2234, %v2337
    %v2339 = vmul.f32 %v2338, %v2128
    %v2340 = vmul.f32 %v2128, 3.0
    %v2341 = vmul.f32 %v2340, %v2339
    %v2342 = vsub.f32 %v2341, %v2234
    %v2343 = vmul.f32 %v2342, 13.927037
    %v2344 = vmul.f32 %v2343, %v1470
    %s2345 = scalar_lea.vmem [#allocation7], 88
    %2346 = vst [vmem:[%s2345] sm:$0xff] %v2344
    %s2347 = scalar_lea.vmem [#allocation7], 96
    %2348 = vst [vmem:[%s2347] sm:$0xff] 0.0
    %s2349 = scalar_lea.vmem [#allocation7], 104
    %2350 = vst [vmem:[%s2349] sm:$0xff] 0.0
    %s2351 = scalar_lea.vmem [#allocation7], 112
    %2352 = vst [vmem:[%s2351] sm:$0xff] 0.0
    %s2353 = scalar_lea.vmem [#allocation7], 120
    %2354 = vst [vmem:[%s2353] sm:$0xff] 0.0
    // Predicated region
    $region18: #{tpu_custom_call.1} parent=1 // pred_check
      _
    $region19: #{tpu_custom_call.1} parent=1 // pred_check_branch
      %2356 = sbr.rel (0) target = $region21
    $region20: #{tpu_custom_call.1} parent=1 // pred_region
      %s2358 = ssub.s32 2048, 2048
      %2359 = vsyncadd [#allocation4], %s2358
      %s2360 = sshll.u32 [#allocation7], 4
      %s2361 = int_to_ptr.vmem [resolvable:$true] %s2360
      %2366 = dma.vmem_to_hbm [thread:$0]  %s2361, 2048, %s2, [#allocation4], 128, 128, 8
    $region21: #{tpu_custom_call.1} parent=1 // pred_fallthru
      _
    // Predicated region
    $region22: #{tpu_custom_call.1} parent=1 // pred_check
      _
    $region23: #{tpu_custom_call.1} parent=1 // pred_check_branch
      %2368 = sbr.rel (0) target = $region25
    $region24: #{tpu_custom_call.1} parent=1 // pred_region
      %2369 = dma.done [#allocation4], 2048
    $region25: #{tpu_custom_call.1} parent=1 // pred_fallthru
      _
    %2370 = vsyncpa [#allocation3], 1
    %2371 = vsyncpa [#allocation6], 1
    %2372 = vsyncpa [#allocation4], 1

</llo_original>
